<compile_context>
chip_gen: v7x
topology: tpu7x:2x2x1
jax: 0.10.0
libtpu: 0.0.40
codegen_flags: <defaults>
</compile_context>

<pallas_src>
import numpy as np
import jax
import jax.numpy as jnp
from jax.experimental import pallas as pl
from jax.experimental.pallas import tpu as pltpu

# ----------------------------- synthetic config ------------------------------
SAMPLE_RATE = 16000
N_FFT = 256            # mel_config['window_size'] (== win_length)
HOP = 128              # mel_config['hop_size'] (N_FFT == 2 * HOP, 50% overlap)
F_MIN = 50.0
F_MAX = 7500.0
N_MELS = 64
TOP_DB = 80.0
T_SAMPLES = 1920       # small synthetic "duration * sample_rate"
BATCH = 2
CLASSES = 2
NUM_CHS = 32           # synthetic base_model.feature_info[-1]['num_chs']
PATCH_H, PATCH_W = 4, 8
HEAD_HIDDEN = 128      # cls_head == '1layer'
GEM_P = 3.0
GEM_EPS = 1e-6
FACTOR = 1
AMIN = 1e-10
INV_LN10 = float(1.0 / np.log(10.0))
OUT_PAD = 128          # lane-dense padded logit width (sliced to CLASSES in wrapper)

N_FREQS = N_FFT // 2               # 128: Nyquist bin dropped (mel weight exactly 0, fmax < sr/2)
N_FRAMES = 1 + T_SAMPLES // HOP    # 16 (center=True framing)
HP = N_FRAMES // PATCH_H           # 4  patches along time
WP = N_MELS // PATCH_W             # 8  patches along mel
N_PATCH = HP * WP                  # 32 spatial positions
BLKW = WP * NUM_CHS                # 256 (pw-major channel layout width)


# --------------------------- host-side constant setup ------------------------
def make_dft_mat():
    """Single (2*HOP, 2*N_FREQS) [cos | sin] windowed-DFT matrix.

    Rows 0:HOP act on the first half of each frame (lo), rows HOP:2*HOP on the second
    half (hi); cols 0:N_FREQS give re, cols N_FREQS:2*N_FREQS give im.
    """
    n = np.arange(N_FFT)
    window = 0.5 - 0.5 * np.cos(2.0 * np.pi * n / N_FFT)        # periodic Hann
    freqs = np.arange(N_FREQS)                                   # 0..127 (Nyquist dropped)
    ang = 2.0 * np.pi * np.outer(n, freqs) / N_FFT               # (n_fft, 128)
    cos_mat = (window[:, None] * np.cos(ang)).astype(np.float32)
    sin_mat = (window[:, None] * np.sin(ang)).astype(np.float32)
    return jnp.asarray(np.concatenate([cos_mat, sin_mat], axis=1))  # (256, 256)


def make_mel_fb():
    # torchaudio-style HTK mel filterbank, norm=None
    n_full = N_FFT // 2 + 1
    all_freqs = np.linspace(0.0, SAMPLE_RATE / 2.0, n_full)
    hz2mel = lambda f: 2595.0 * np.log10(1.0 + f / 700.0)
    mel2hz = lambda m: 700.0 * (10.0 ** (m / 2595.0) - 1.0)
    m_pts = np.linspace(hz2mel(F_MIN), hz2mel(F_MAX), N_MELS + 2)
    f_pts = mel2hz(m_pts)
    f_diff = f_pts[1:] - f_pts[:-1]
    slopes = f_pts[None, :] - all_freqs[:, None]
    down = -slopes[:, :-2] / f_diff[:-1]
    up = slopes[:, 2:] / f_diff[1:]
    fb = np.maximum(0.0, np.minimum(down, up)).astype(np.float32)  # (129, 64)
    # Nyquist row (8 kHz) has all-zero filters for fmax=7500 -> bit-identical to drop it.
    return jnp.asarray(fb[:N_FREQS])                               # (128, 64)


def make_patch_mats(w_enc, b_enc):
    """Express the patch-embed conv as one wide matmul + small row-fold matmuls.

    t_all[r, i*BLKW + pw*C + c] = sum_j spec[r, PATCH_W*pw + j] * w[i*PATCH_W + j, c]
    feat[b*HP+ph, pw*C+c]       = sum_i t_all[b*F + PATCH_H*ph + i, i*BLKW + pw*C + c] + bias[c]
    GeM channel fold:  pooled_sum[b, c] = per_sample[b] @ Msum
    """
    w = np.asarray(w_enc)                      # (PATCH_H*PATCH_W, NUM_CHS)
    b = np.asarray(b_enc).reshape(1, NUM_CHS)

    wcol = np.zeros((N_MELS, PATCH_H * BLKW), np.float32)      # (64, 1024)
    for i in range(PATCH_H):
        for pw in range(WP):
            for j in range(PATCH_W):
                col0 = i * BLKW + pw * NUM_CHS
                wcol[PATCH_W * pw + j, col0:col0 + NUM_CHS] = w[i * PATCH_W + j, :]

    b_tiled = np.tile(b, (1, WP)).astype(np.float32)            # (1, 256)

    msum = np.zeros((BLKW, NUM_CHS), np.float32)                # (256, 32)
    for pw in range(WP):
        msum[pw * NUM_CHS:(pw + 1) * NUM_CHS, :] = np.eye(NUM_CHS, dtype=np.float32)

    return jnp.asarray(wcol), jnp.asarray(b_tiled), jnp.asarray(msum)


def make_batch_fold_mats(batch):
    """Batch-dependent fold matrices (block-diagonal over the batch)."""
    fold = np.zeros((PATCH_H, batch * HP, batch * N_FRAMES), np.float32)   # (4, B*HP, B*F)
    for i in range(PATCH_H):
        for b in range(batch):
            for ph in range(HP):
                fold[i, b * HP + ph, b * N_FRAMES + PATCH_H * ph + i] = 1.0
    row_fold = np.zeros((batch, batch * HP), np.float32)                   # (B, B*HP)
    for b in range(batch):
        row_fold[b, b * HP:(b + 1) * HP] = 1.0
    return jnp.asarray(fold), jnp.asarray(row_fold)


def init_params(key, batch=BATCH):
    k_enc, k_w1, k_w2 = jax.random.split(key, 3)
    k_patch = PATCH_H * PATCH_W * 1
    # TODO(synk): the pretrained timm `features_only` backbone (out_indices=[4]) is not
    # reproducible here; a single deterministic patch-embed conv is used as a stand-in.
    w_enc = jax.random.normal(k_enc, (k_patch, NUM_CHS), jnp.float32) * 0.05
    b_enc = jnp.zeros((NUM_CHS,), jnp.float32)
    w_col, b_enc_tiled, m_sum = make_patch_mats(w_enc, b_enc)
    fold, row_fold = make_batch_fold_mats(batch)

    w2 = jax.random.normal(k_w2, (HEAD_HIDDEN, CLASSES), jnp.float32) * 0.05
    w2_pad = jnp.zeros((HEAD_HIDDEN, OUT_PAD), jnp.float32).at[:, :CLASSES].set(w2)
    b2_pad = jnp.zeros((1, OUT_PAD), jnp.float32)

    # TODO(synk): on v5e the ~620 KB of f32 constants set the DMA floor; they could be
    # stored in bf16 (MXU consumes bf16 with f32 accumulation) at a small numeric cost.
    return {
        "cs_mat": make_dft_mat(),      # (256, 256) [cos | sin]
        "mel_fb": make_mel_fb(),       # (128, 64)
        "w_col": w_col,                # (64, 1024) block-structured patch-embed weight
        "b_enc_tiled": b_enc_tiled,    # (1, 256)
        "m_sum": m_sum,                # (256, 32) channel-fold matrix
        "fold": fold,                  # (4, B*HP, B*F) row-fold selection
        "row_fold": row_fold,          # (B, B*HP) per-sample spatial-sum fold
        # '1layer' head: Linear(C,128) -> Dropout(id in eval) -> GELU -> Linear(128,classes)
        "w1": jax.random.normal(k_w1, (NUM_CHS, HEAD_HIDDEN), jnp.float32) * 0.05,
        "b1": jnp.zeros((1, HEAD_HIDDEN), jnp.float32),
        "w2_pad": w2_pad,              # (128, 128) zero-padded beyond CLASSES
        "b2_pad": b2_pad,              # (1, 128)
    }


# ------------------------------ fused Pallas kernel ----------------------------
def fused_forward_kernel(lo_ref, hi_ref, cs_ref, fb_ref, wcol_ref, fold_ref, benc_ref,
                         rowfold_ref, msum_ref, w1_ref, b1_ref, w2_ref, b2_ref, out_ref):
    f32 = jnp.float32
    rows = lo_ref.shape[0]            # B * N_FRAMES (static)
    batch = rows // N_FRAMES

    # --- windowed DFT power spectrogram: ONE (B*F, 256) @ (256, 256) matmul ---
    frames = jnp.concatenate([lo_ref[...], hi_ref[...]], axis=-1)        # (B*F, 2*HOP)
    reim = jnp.dot(frames, cs_ref[...], preferred_element_type=f32)      # (B*F, 2*N_FREQS)
    re = reim[:, :N_FREQS]
    im = reim[:, N_FREQS:]
    power = re * re + im * im                                            # (B*F, 128)

    # --- mel filterbank + AmplitudeToDB (power, ref=1.0, amin, top_db) + (x+80)/80 ---
    mel = jnp.dot(power, fb_ref[...], preferred_element_type=f32)        # (B*F, 64)
    db = (10.0 * INV_LN10) * jnp.log(jnp.maximum(mel, AMIN))
    # per-spectrogram (per-sample) top_db clamp on static, tile-aligned row blocks
    blocks = []
    for b in range(batch):                                               # static loop
        blk = db[b * N_FRAMES:(b + 1) * N_FRAMES, :]                     # (16, 64)
        mb = jnp.max(jnp.max(blk, axis=1, keepdims=True), axis=0, keepdims=True)
        blk = jnp.maximum(blk, mb - TOP_DB)
        blocks.append((blk + 80.0) * (1.0 / 80.0))
    spec = jnp.concatenate(blocks, axis=0) if batch > 1 else blocks[0]   # (B*F, 64)

    # --- encoder stand-in: patch-embed conv = one wide matmul + 4 tiny row-folds ---
    t_all = jnp.dot(spec, wcol_ref[...], preferred_element_type=f32)     # (B*F, 4*256)
    feat = jnp.zeros((batch * HP, BLKW), f32)
    for i in range(PATCH_H):                                             # static, 4
        feat = feat + jnp.dot(fold_ref[i], t_all[:, i * BLKW:(i + 1) * BLKW],
                              preferred_element_type=f32)                # (B*HP, 256)
    feat = feat + benc_ref[...]                                          # channel c at lane pw*C + c

    # --- GeM pooling: clamp^3 (p == 3 exactly) -> mean over spatial -> ^(1/3) ---
    g = jnp.maximum(feat, GEM_EPS)
    g3 = g * g * g
    per_sample = jnp.dot(rowfold_ref[...], g3, preferred_element_type=f32)      # (B, 256)
    pooled_sum = jnp.dot(per_sample, msum_ref[...], preferred_element_type=f32)  # (B, C)
    pooled = jnp.exp(jnp.log(pooled_sum * (1.0 / float(N_PATCH))) * (1.0 / GEM_P))

    # --- '1layer' head (eval mode: dropout = identity) ---
    h = jnp.dot(pooled, w1_ref[...], preferred_element_type=f32) + b1_ref[...]
    # TODO(synk): PyTorch nn.GELU() uses the exact erf form; tanh approximation used here.
    h = 0.5 * h * (1.0 + jnp.tanh(0.7978845608028654 * (h + 0.044715 * h * h * h)))
    out_ref[...] = jnp.dot(h, w2_ref[...], preferred_element_type=f32) + b2_ref[...]


def fused_forward(lo, hi, p):
    rows = lo.shape[0]                 # B * N_FRAMES
    batch = rows // N_FRAMES
    assert p["row_fold"].shape[0] == batch, "params built for a different batch size"

    def const(a):
        nd = a.ndim
        return pl.BlockSpec(a.shape, lambda i, _n=nd: (0,) * _n)

    out = pl.pallas_call(
        fused_forward_kernel,
        out_shape=jax.ShapeDtypeStruct((batch, OUT_PAD), jnp.float32),
        grid=(1,),                                              # whole batch in one step
        in_specs=[
            pl.BlockSpec((rows, HOP), lambda i: (0, 0)),        # lo half-frames
            pl.BlockSpec((rows, HOP), lambda i: (0, 0)),        # hi half-frames
            const(p["cs_mat"]),                                 # fused [cos|sin] DFT matrix
            const(p["mel_fb"]),                                 # mel filterbank
            const(p["w_col"]),                                  # patch-embed weights (wide)
            const(p["fold"]),                                   # row-fold selection mats
            const(p["b_enc_tiled"]),                            # tiled enc bias
            const(p["row_fold"]),                               # per-sample spatial fold
            const(p["m_sum"]),                                  # channel-fold matrix
            const(p["w1"]), const(p["b1"]),                     # head layer 1
            const(p["w2_pad"]), const(p["b2_pad"]),             # head layer 2 (lane-padded)
        ],
        out_specs=pl.BlockSpec((batch, OUT_PAD), lambda i: (0, 0)),
        compiler_params=pltpu.CompilerParams(dimension_semantics=("arbitrary",)),
    )(lo, hi, p["cs_mat"], p["mel_fb"], p["w_col"], p["fold"], p["b_enc_tiled"],
      p["row_fold"], p["m_sum"], p["w1"], p["b1"], p["w2_pad"], p["b2_pad"])
    return out[:, :CLASSES]


# ------------------------------ module forward ---------------------------------
def timm_classifier_v3_forward(x, params, is_test=False):
    # eval mode: F.dropout / nn.Dropout are identity; masking disabled.
    wav = x[:, 0, :]                                                  # (B, T)
    if not is_test:
        bs, time = wav.shape
        wav = wav.reshape(bs * FACTOR, time // FACTOR)                # factor == 1
    # reflect pad for center=True STFT framing, then view as HOP-sized blocks
    padded = jnp.pad(wav, ((0, 0), (N_FFT // 2, N_FFT // 2)), mode="reflect")
    B = padded.shape[0]
    lo = padded[:, : N_FRAMES * HOP].reshape(B * N_FRAMES, HOP)       # frame first halves
    hi = padded[:, HOP: HOP + N_FRAMES * HOP].reshape(B * N_FRAMES, HOP)  # frame second halves

    logit = fused_forward(lo, hi, params)                             # (B, classes)

    # The 5 head passes are bit-identical in eval mode; keep the original
    # repeated-add accumulation on the tiny (B, classes) logit.
    list_logits = [logit for _ in range(5)]
    logit_avg = logit
    for _ in range(4):
        logit_avg = logit_avg + logit
    return {"logit": logit_avg, "list_logits": list_logits}


# ----------------------------------- main ---------------------------------------
if __name__ == "__main__":
    key = jax.random.PRNGKey(0)
    k_x, k_p = jax.random.split(key)
    x = jax.random.normal(k_x, (BATCH, 1, T_SAMPLES), dtype=jnp.float32) * 0.1
    params = init_params(k_p, batch=BATCH)

    out = timm_classifier_v3_forward(x, params, is_test=False)
    jax.block_until_ready(out["logit"])
    jax.block_until_ready(out["list_logits"][-1])
    assert out["logit"].shape == (BATCH, CLASSES)
    assert len(out["list_logits"]) == 5
    assert bool(jnp.all(jnp.isfinite(out["logit"])))
    print("KERNEL_OK")
</pallas_src>

<mosaic_0001>
module attributes {stable_mosaic.version = 11 : i64} {
  func.func @fused_forward_kernel(%arg0: i32, %arg1: memref<32x128xf32, #tpu.memory_space<vmem>>, %arg2: memref<32x128xf32, #tpu.memory_space<vmem>>, %arg3: memref<256x256xf32, #tpu.memory_space<vmem>>, %arg4: memref<128x64xf32, #tpu.memory_space<vmem>>, %arg5: memref<64x1024xf32, #tpu.memory_space<vmem>>, %arg6: memref<4x8x32xf32, #tpu.memory_space<vmem>>, %arg7: memref<1x256xf32, #tpu.memory_space<vmem>>, %arg8: memref<2x8xf32, #tpu.memory_space<vmem>>, %arg9: memref<256x32xf32, #tpu.memory_space<vmem>>, %arg10: memref<32x128xf32, #tpu.memory_space<vmem>>, %arg11: memref<1x128xf32, #tpu.memory_space<vmem>>, %arg12: memref<128x128xf32, #tpu.memory_space<vmem>>, %arg13: memref<1x128xf32, #tpu.memory_space<vmem>>, %arg14: memref<2x128xf32, #tpu.memory_space<vmem>>) attributes {dimension_semantics = [#tpu.dimension_semantics<arbitrary>], iteration_bounds = array<i64: 1>, scalar_prefetch = 0 : i64, scratch_operands = 0 : i64, tpu.core_type = #tpu.core_type<tc>, window_params = [{pipeline_mode = #tpu.pipeline_mode<synchronous>, transform_indices = @transform_0, window_bounds = array<i64: 32, 128>}, {pipeline_mode = #tpu.pipeline_mode<synchronous>, transform_indices = @transform_1, window_bounds = array<i64: 32, 128>}, {pipeline_mode = #tpu.pipeline_mode<synchronous>, transform_indices = @transform_2, window_bounds = array<i64: 256, 256>}, {pipeline_mode = #tpu.pipeline_mode<synchronous>, transform_indices = @transform_3, window_bounds = array<i64: 128, 64>}, {pipeline_mode = #tpu.pipeline_mode<synchronous>, transform_indices = @transform_4, window_bounds = array<i64: 64, 1024>}, {pipeline_mode = #tpu.pipeline_mode<synchronous>, transform_indices = @transform_5, window_bounds = array<i64: 4, 8, 32>}, {pipeline_mode = #tpu.pipeline_mode<synchronous>, transform_indices = @transform_6, window_bounds = array<i64: 1, 256>}, {pipeline_mode = #tpu.pipeline_mode<synchronous>, transform_indices = @transform_7, window_bounds = array<i64: 2, 8>}, {pipeline_mode = #tpu.pipeline_mode<synchronous>, transform_indices = @transform_8, window_bounds = array<i64: 256, 32>}, {pipeline_mode = #tpu.pipeline_mode<synchronous>, transform_indices = @transform_9, window_bounds = array<i64: 32, 128>}, {pipeline_mode = #tpu.pipeline_mode<synchronous>, transform_indices = @transform_10, window_bounds = array<i64: 1, 128>}, {pipeline_mode = #tpu.pipeline_mode<synchronous>, transform_indices = @transform_11, window_bounds = array<i64: 128, 128>}, {pipeline_mode = #tpu.pipeline_mode<synchronous>, transform_indices = @transform_12, window_bounds = array<i64: 1, 128>}, {pipeline_mode = #tpu.pipeline_mode<synchronous>, transform_indices = @transform_13, window_bounds = array<i64: 2, 128>}]} {
    %c0 = arith.constant 0 : index
    %c0_0 = arith.constant 0 : index
    %0 = vector.load %arg1[%c0, %c0_0] : memref<32x128xf32, #tpu.memory_space<vmem>>, vector<32x128xf32>
    %c0_1 = arith.constant 0 : index
    %c0_2 = arith.constant 0 : index
    %1 = vector.load %arg2[%c0_1, %c0_2] : memref<32x128xf32, #tpu.memory_space<vmem>>, vector<32x128xf32>
    %2 = tpu.concatenate %0, %1 in 1 : vector<32x128xf32>, vector<32x128xf32> -> vector<32x256xf32>
    %c0_3 = arith.constant 0 : index
    %c0_4 = arith.constant 0 : index
    %3 = vector.load %arg3[%c0_3, %c0_4] : memref<256x256xf32, #tpu.memory_space<vmem>>, vector<256x256xf32>
    %cst = arith.constant dense<0.000000e+00> : vector<32x256xf32>
    %4 = tpu.matmul %2, %3, %cst {dimension_numbers = #tpu.dot_dimension_numbers<[1], [0], [0], [1], [0, 0, 1, 1], [], []>} : vector<32x256xf32>, vector<256x256xf32>, vector<32x256xf32> -> vector<32x256xf32>
    %5 = vector.extract_strided_slice %4 {offsets = [0, 0], sizes = [32, 128], strides = [1, 1]} : vector<32x256xf32> to vector<32x128xf32>
    %6 = vector.extract_strided_slice %4 {offsets = [0, 128], sizes = [32, 128], strides = [1, 1]} : vector<32x256xf32> to vector<32x128xf32>
    %7 = arith.mulf %5, %5 : vector<32x128xf32>
    %8 = arith.mulf %6, %6 : vector<32x128xf32>
    %9 = arith.addf %7, %8 : vector<32x128xf32>
    %c0_5 = arith.constant 0 : index
    %c0_6 = arith.constant 0 : index
    %10 = vector.load %arg4[%c0_5, %c0_6] : memref<128x64xf32, #tpu.memory_space<vmem>>, vector<128x64xf32>
    %cst_7 = arith.constant dense<0.000000e+00> : vector<32x64xf32>
    %11 = tpu.matmul %9, %10, %cst_7 {dimension_numbers = #tpu.dot_dimension_numbers<[1], [0], [0], [1], [0, 0, 1, 1], [], []>} : vector<32x128xf32>, vector<128x64xf32>, vector<32x64xf32> -> vector<32x64xf32>
    %cst_8 = arith.constant 1.000000e-10 : f32
    %12 = vector.broadcast %cst_8 : f32 to vector<32x64xf32>
    %13 = arith.maximumf %11, %12 : vector<32x64xf32>
    %14 = math.log %13 : vector<32x64xf32>
    %cst_9 = arith.constant 4.34294462 : f32
    %15 = vector.broadcast %cst_9 : f32 to vector<32x64xf32>
    %16 = arith.mulf %15, %14 : vector<32x64xf32>
    %17 = vector.extract_strided_slice %16 {offsets = [0, 0], sizes = [16, 64], strides = [1, 1]} : vector<32x64xf32> to vector<16x64xf32>
    %cst_10 = arith.constant dense<0xFF800000> : vector<16xf32>
    %18 = vector.multi_reduction <maximumf>, %17, %cst_10 [1] : vector<16x64xf32> to vector<16xf32>
    %19 = vector.shape_cast %18 : vector<16xf32> to vector<16x1xf32>
    %cst_11 = arith.constant dense<0xFF800000> : vector<1xf32>
    %20 = vector.multi_reduction <maximumf>, %19, %cst_11 [0] : vector<16x1xf32> to vector<1xf32>
    %21 = vector.shape_cast %20 : vector<1xf32> to vector<1x1xf32>
    %cst_12 = arith.constant 8.000000e+01 : f32
    %22 = vector.broadcast %cst_12 : f32 to vector<1x1xf32>
    %23 = arith.subf %21, %22 : vector<1x1xf32>
    %24 = vector.broadcast %23 : vector<1x1xf32> to vector<16x64xf32>
    %25 = arith.maximumf %17, %24 : vector<16x64xf32>
    %cst_13 = arith.constant 8.000000e+01 : f32
    %26 = vector.broadcast %cst_13 : f32 to vector<16x64xf32>
    %27 = arith.addf %25, %26 : vector<16x64xf32>
    %cst_14 = arith.constant 1.250000e-02 : f32
    %28 = vector.broadcast %cst_14 : f32 to vector<16x64xf32>
    %29 = arith.mulf %27, %28 : vector<16x64xf32>
    %30 = vector.extract_strided_slice %16 {offsets = [16, 0], sizes = [16, 64], strides = [1, 1]} : vector<32x64xf32> to vector<16x64xf32>
    %cst_15 = arith.constant dense<0xFF800000> : vector<16xf32>
    %31 = vector.multi_reduction <maximumf>, %30, %cst_15 [1] : vector<16x64xf32> to vector<16xf32>
    %32 = vector.shape_cast %31 : vector<16xf32> to vector<16x1xf32>
    %cst_16 = arith.constant dense<0xFF800000> : vector<1xf32>
    %33 = vector.multi_reduction <maximumf>, %32, %cst_16 [0] : vector<16x1xf32> to vector<1xf32>
    %34 = vector.shape_cast %33 : vector<1xf32> to vector<1x1xf32>
    %cst_17 = arith.constant 8.000000e+01 : f32
    %35 = vector.broadcast %cst_17 : f32 to vector<1x1xf32>
    %36 = arith.subf %34, %35 : vector<1x1xf32>
    %37 = vector.broadcast %36 : vector<1x1xf32> to vector<16x64xf32>
    %38 = arith.maximumf %30, %37 : vector<16x64xf32>
    %cst_18 = arith.constant 8.000000e+01 : f32
    %39 = vector.broadcast %cst_18 : f32 to vector<16x64xf32>
    %40 = arith.addf %38, %39 : vector<16x64xf32>
    %cst_19 = arith.constant 1.250000e-02 : f32
    %41 = vector.broadcast %cst_19 : f32 to vector<16x64xf32>
    %42 = arith.mulf %40, %41 : vector<16x64xf32>
    %43 = tpu.concatenate %29, %42 in 0 : vector<16x64xf32>, vector<16x64xf32> -> vector<32x64xf32>
    %c0_20 = arith.constant 0 : index
    %c0_21 = arith.constant 0 : index
    %44 = vector.load %arg5[%c0_20, %c0_21] : memref<64x1024xf32, #tpu.memory_space<vmem>>, vector<64x1024xf32>
    %cst_22 = arith.constant dense<0.000000e+00> : vector<32x1024xf32>
    %45 = tpu.matmul %43, %44, %cst_22 {dimension_numbers = #tpu.dot_dimension_numbers<[1], [0], [0], [1], [0, 0, 1, 1], [], []>} : vector<32x64xf32>, vector<64x1024xf32>, vector<32x1024xf32> -> vector<32x1024xf32>
    %cst_23 = arith.constant 0.000000e+00 : f32
    %46 = vector.broadcast %cst_23 : f32 to vector<8x256xf32>
    %c0_24 = arith.constant 0 : index
    %c0_25 = arith.constant 0 : index
    %c0_26 = arith.constant 0 : index
    %47 = vector.load %arg6[%c0_24, %c0_25, %c0_26] : memref<4x8x32xf32, #tpu.memory_space<vmem>>, vector<1x8x32xf32>
    %48 = vector.shape_cast %47 : vector<1x8x32xf32> to vector<8x32xf32>
    %49 = vector.extract_strided_slice %45 {offsets = [0, 0], sizes = [32, 256], strides = [1, 1]} : vector<32x1024xf32> to vector<32x256xf32>
    %cst_27 = arith.constant dense<0.000000e+00> : vector<8x256xf32>
    %50 = tpu.matmul %48, %49, %cst_27 {dimension_numbers = #tpu.dot_dimension_numbers<[1], [0], [0], [1], [0, 0, 1, 1], [], []>} : vector<8x32xf32>, vector<32x256xf32>, vector<8x256xf32> -> vector<8x256xf32>
    %51 = arith.addf %46, %50 : vector<8x256xf32>
    %c1 = arith.constant 1 : index
    %c0_28 = arith.constant 0 : index
    %c0_29 = arith.constant 0 : index
    %52 = vector.load %arg6[%c1, %c0_28, %c0_29] : memref<4x8x32xf32, #tpu.memory_space<vmem>>, vector<1x8x32xf32>
    %53 = vector.shape_cast %52 : vector<1x8x32xf32> to vector<8x32xf32>
    %54 = vector.extract_strided_slice %45 {offsets = [0, 256], sizes = [32, 256], strides = [1, 1]} : vector<32x1024xf32> to vector<32x256xf32>
    %cst_30 = arith.constant dense<0.000000e+00> : vector<8x256xf32>
    %55 = tpu.matmul %53, %54, %cst_30 {dimension_numbers = #tpu.dot_dimension_numbers<[1], [0], [0], [1], [0, 0, 1, 1], [], []>} : vector<8x32xf32>, vector<32x256xf32>, vector<8x256xf32> -> vector<8x256xf32>
    %56 = arith.addf %51, %55 : vector<8x256xf32>
    %c2 = arith.constant 2 : index
    %c0_31 = arith.constant 0 : index
    %c0_32 = arith.constant 0 : index
    %57 = vector.load %arg6[%c2, %c0_31, %c0_32] : memref<4x8x32xf32, #tpu.memory_space<vmem>>, vector<1x8x32xf32>
    %58 = vector.shape_cast %57 : vector<1x8x32xf32> to vector<8x32xf32>
    %59 = vector.extract_strided_slice %45 {offsets = [0, 512], sizes = [32, 256], strides = [1, 1]} : vector<32x1024xf32> to vector<32x256xf32>
    %cst_33 = arith.constant dense<0.000000e+00> : vector<8x256xf32>
    %60 = tpu.matmul %58, %59, %cst_33 {dimension_numbers = #tpu.dot_dimension_numbers<[1], [0], [0], [1], [0, 0, 1, 1], [], []>} : vector<8x32xf32>, vector<32x256xf32>, vector<8x256xf32> -> vector<8x256xf32>
    %61 = arith.addf %56, %60 : vector<8x256xf32>
    %c3 = arith.constant 3 : index
    %c0_34 = arith.constant 0 : index
    %c0_35 = arith.constant 0 : index
    %62 = vector.load %arg6[%c3, %c0_34, %c0_35] : memref<4x8x32xf32, #tpu.memory_space<vmem>>, vector<1x8x32xf32>
    %63 = vector.shape_cast %62 : vector<1x8x32xf32> to vector<8x32xf32>
    %64 = vector.extract_strided_slice %45 {offsets = [0, 768], sizes = [32, 256], strides = [1, 1]} : vector<32x1024xf32> to vector<32x256xf32>
    %cst_36 = arith.constant dense<0.000000e+00> : vector<8x256xf32>
    %65 = tpu.matmul %63, %64, %cst_36 {dimension_numbers = #tpu.dot_dimension_numbers<[1], [0], [0], [1], [0, 0, 1, 1], [], []>} : vector<8x32xf32>, vector<32x256xf32>, vector<8x256xf32> -> vector<8x256xf32>
    %66 = arith.addf %61, %65 : vector<8x256xf32>
    %c0_37 = arith.constant 0 : index
    %c0_38 = arith.constant 0 : index
    %67 = vector.load %arg7[%c0_37, %c0_38] : memref<1x256xf32, #tpu.memory_space<vmem>>, vector<1x256xf32>
    %68 = vector.broadcast %67 : vector<1x256xf32> to vector<8x256xf32>
    %69 = arith.addf %66, %68 : vector<8x256xf32>
    %cst_39 = arith.constant 9.99999997E-7 : f32
    %70 = vector.broadcast %cst_39 : f32 to vector<8x256xf32>
    %71 = arith.maximumf %69, %70 : vector<8x256xf32>
    %72 = arith.mulf %71, %71 : vector<8x256xf32>
    %73 = arith.mulf %72, %71 : vector<8x256xf32>
    %c0_40 = arith.constant 0 : index
    %c0_41 = arith.constant 0 : index
    %74 = vector.load %arg8[%c0_40, %c0_41] : memref<2x8xf32, #tpu.memory_space<vmem>>, vector<2x8xf32>
    %cst_42 = arith.constant dense<0.000000e+00> : vector<2x256xf32>
    %75 = tpu.matmul %74, %73, %cst_42 {dimension_numbers = #tpu.dot_dimension_numbers<[1], [0], [0], [1], [0, 0, 1, 1], [], []>} : vector<2x8xf32>, vector<8x256xf32>, vector<2x256xf32> -> vector<2x256xf32>
    %c0_43 = arith.constant 0 : index
    %c0_44 = arith.constant 0 : index
    %76 = vector.load %arg9[%c0_43, %c0_44] : memref<256x32xf32, #tpu.memory_space<vmem>>, vector<256x32xf32>
    %cst_45 = arith.constant dense<0.000000e+00> : vector<2x32xf32>
    %77 = tpu.matmul %75, %76, %cst_45 {dimension_numbers = #tpu.dot_dimension_numbers<[1], [0], [0], [1], [0, 0, 1, 1], [], []>} : vector<2x256xf32>, vector<256x32xf32>, vector<2x32xf32> -> vector<2x32xf32>
    %cst_46 = arith.constant 3.125000e-02 : f32
    %78 = vector.broadcast %cst_46 : f32 to vector<2x32xf32>
    %79 = arith.mulf %77, %78 : vector<2x32xf32>
    %80 = math.log %79 : vector<2x32xf32>
    %cst_47 = arith.constant 0.333333343 : f32
    %81 = vector.broadcast %cst_47 : f32 to vector<2x32xf32>
    %82 = arith.mulf %80, %81 : vector<2x32xf32>
    %83 = math.exp %82 : vector<2x32xf32>
    %c0_48 = arith.constant 0 : index
    %c0_49 = arith.constant 0 : index
    %84 = vector.load %arg10[%c0_48, %c0_49] : memref<32x128xf32, #tpu.memory_space<vmem>>, vector<32x128xf32>
    %cst_50 = arith.constant dense<0.000000e+00> : vector<2x128xf32>
    %85 = tpu.matmul %83, %84, %cst_50 {dimension_numbers = #tpu.dot_dimension_numbers<[1], [0], [0], [1], [0, 0, 1, 1], [], []>} : vector<2x32xf32>, vector<32x128xf32>, vector<2x128xf32> -> vector<2x128xf32>
    %c0_51 = arith.constant 0 : index
    %c0_52 = arith.constant 0 : index
    %86 = vector.load %arg11[%c0_51, %c0_52] : memref<1x128xf32, #tpu.memory_space<vmem>>, vector<1x128xf32>
    %87 = vector.broadcast %86 : vector<1x128xf32> to vector<2x128xf32>
    %88 = arith.addf %85, %87 : vector<2x128xf32>
    %cst_53 = arith.constant 5.000000e-01 : f32
    %89 = vector.broadcast %cst_53 : f32 to vector<2x128xf32>
    %90 = arith.mulf %89, %88 : vector<2x128xf32>
    %cst_54 = arith.constant 4.471500e-02 : f32
    %91 = vector.broadcast %cst_54 : f32 to vector<2x128xf32>
    %92 = arith.mulf %91, %88 : vector<2x128xf32>
    %93 = arith.mulf %92, %88 : vector<2x128xf32>
    %94 = arith.mulf %93, %88 : vector<2x128xf32>
    %95 = arith.addf %88, %94 : vector<2x128xf32>
    %cst_55 = arith.constant 0.797884583 : f32
    %96 = vector.broadcast %cst_55 : f32 to vector<2x128xf32>
    %97 = arith.mulf %96, %95 : vector<2x128xf32>
    %98 = math.tanh %97 : vector<2x128xf32>
    %cst_56 = arith.constant 1.000000e+00 : f32
    %99 = vector.broadcast %cst_56 : f32 to vector<2x128xf32>
    %100 = arith.addf %99, %98 : vector<2x128xf32>
    %101 = arith.mulf %90, %100 : vector<2x128xf32>
    %c0_57 = arith.constant 0 : index
    %c0_58 = arith.constant 0 : index
    %102 = vector.load %arg12[%c0_57, %c0_58] : memref<128x128xf32, #tpu.memory_space<vmem>>, vector<128x128xf32>
    %cst_59 = arith.constant dense<0.000000e+00> : vector<2x128xf32>
    %103 = tpu.matmul %101, %102, %cst_59 {dimension_numbers = #tpu.dot_dimension_numbers<[1], [0], [0], [1], [0, 0, 1, 1], [], []>} : vector<2x128xf32>, vector<128x128xf32>, vector<2x128xf32> -> vector<2x128xf32>
    %c0_60 = arith.constant 0 : index
    %c0_61 = arith.constant 0 : index
    %104 = vector.load %arg13[%c0_60, %c0_61] : memref<1x128xf32, #tpu.memory_space<vmem>>, vector<1x128xf32>
    %105 = vector.broadcast %104 : vector<1x128xf32> to vector<2x128xf32>
    %106 = arith.addf %103, %105 : vector<2x128xf32>
    %c0_62 = arith.constant 0 : index
    %c0_63 = arith.constant 0 : index
    %107 = vector.load %arg14[%c0_62, %c0_63] : memref<2x128xf32, #tpu.memory_space<vmem>>, vector<2x128xf32>
    tpu.vector_store %arg14[%c0_62, %c0_63], %106 {strides = array<i32>} : memref<2x128xf32, #tpu.memory_space<vmem>>, vector<2x128xf32>,
    return
  }
  func.func @transform_0(%arg0: i32) -> (i32, i32) {
    %c0_i32 = arith.constant 0 : i32
    %c0_i32_0 = arith.constant 0 : i32
    %c0_i32_1 = arith.constant 0 : i32
    return %c0_i32, %c0_i32_0 : i32, i32
  }
  func.func @transform_1(%arg0: i32) -> (i32, i32) {
    %c0_i32 = arith.constant 0 : i32
    %c0_i32_0 = arith.constant 0 : i32
    %c0_i32_1 = arith.constant 0 : i32
    return %c0_i32, %c0_i32_0 : i32, i32
  }
  func.func @transform_2(%arg0: i32) -> (i32, i32) {
    %c0_i32 = arith.constant 0 : i32
    %c0_i32_0 = arith.constant 0 : i32
    %c0_i32_1 = arith.constant 0 : i32
    return %c0_i32, %c0_i32_0 : i32, i32
  }
  func.func @transform_3(%arg0: i32) -> (i32, i32) {
    %c0_i32 = arith.constant 0 : i32
    %c0_i32_0 = arith.constant 0 : i32
    %c0_i32_1 = arith.constant 0 : i32
    return %c0_i32, %c0_i32_0 : i32, i32
  }
  func.func @transform_4(%arg0: i32) -> (i32, i32) {
    %c0_i32 = arith.constant 0 : i32
    %c0_i32_0 = arith.constant 0 : i32
    %c0_i32_1 = arith.constant 0 : i32
    return %c0_i32, %c0_i32_0 : i32, i32
  }
  func.func @transform_5(%arg0: i32) -> (i32, i32, i32) {
    %c0_i32 = arith.constant 0 : i32
    %c0_i32_0 = arith.constant 0 : i32
    %c0_i32_1 = arith.constant 0 : i32
    %c0_i32_2 = arith.constant 0 : i32
    return %c0_i32, %c0_i32_0, %c0_i32_1 : i32, i32, i32
  }
  func.func @transform_6(%arg0: i32) -> (i32, i32) {
    %c0_i32 = arith.constant 0 : i32
    %c0_i32_0 = arith.constant 0 : i32
    %c0_i32_1 = arith.constant 0 : i32
    return %c0_i32, %c0_i32_0 : i32, i32
  }
  func.func @transform_7(%arg0: i32) -> (i32, i32) {
    %c0_i32 = arith.constant 0 : i32
    %c0_i32_0 = arith.constant 0 : i32
    %c0_i32_1 = arith.constant 0 : i32
    return %c0_i32, %c0_i32_0 : i32, i32
  }
  func.func @transform_8(%arg0: i32) -> (i32, i32) {
    %c0_i32 = arith.constant 0 : i32
    %c0_i32_0 = arith.constant 0 : i32
    %c0_i32_1 = arith.constant 0 : i32
    return %c0_i32, %c0_i32_0 : i32, i32
  }
  func.func @transform_9(%arg0: i32) -> (i32, i32) {
    %c0_i32 = arith.constant 0 : i32
    %c0_i32_0 = arith.constant 0 : i32
    %c0_i32_1 = arith.constant 0 : i32
    return %c0_i32, %c0_i32_0 : i32, i32
  }
  func.func @transform_10(%arg0: i32) -> (i32, i32) {
    %c0_i32 = arith.constant 0 : i32
    %c0_i32_0 = arith.constant 0 : i32
    %c0_i32_1 = arith.constant 0 : i32
    return %c0_i32, %c0_i32_0 : i32, i32
  }
  func.func @transform_11(%arg0: i32) -> (i32, i32) {
    %c0_i32 = arith.constant 0 : i32
    %c0_i32_0 = arith.constant 0 : i32
    %c0_i32_1 = arith.constant 0 : i32
    return %c0_i32, %c0_i32_0 : i32, i32
  }
  func.func @transform_12(%arg0: i32) -> (i32, i32) {
    %c0_i32 = arith.constant 0 : i32
    %c0_i32_0 = arith.constant 0 : i32
    %c0_i32_1 = arith.constant 0 : i32
    return %c0_i32, %c0_i32_0 : i32, i32
  }
  func.func @transform_13(%arg0: i32) -> (i32, i32) {
    %c0_i32 = arith.constant 0 : i32
    %c0_i32_0 = arith.constant 0 : i32
    %c0_i32_1 = arith.constant 0 : i32
    return %c0_i32, %c0_i32_0 : i32, i32
  }
}

</mosaic_0001>

<llo_original>
// kernel: tpu_custom_call.1
$region0: #{tpu_custom_call.1}
  #allocation0 [shape = 'u32[]', space=smem, size = 0x4, offset = 0x4, fixed_abs, tag = 'smem constant byte address 0x4 - core index']
  #allocation1 [shape = 'u32[144,128]{1,0:T(1,128)}', space=vmem, size = 0x12000, scoped, tag = 'internal scratch']
  %s0 = inlined_call_operand.hbm [shape: f32[32,128], index: 0, kind: input, shape index: {}]
  %s1 = inlined_call_operand.hbm [shape: f32[32,128], index: 1, kind: input, shape index: {}]
  %s2 = inlined_call_operand.vmem [shape: f32[256,256], index: 2, kind: input, shape index: {}]
  %s3 = inlined_call_operand.vmem [shape: f32[128,64], index: 3, kind: input, shape index: {}]
  %s4 = inlined_call_operand.hbm [shape: f32[64,1024], index: 4, kind: input, shape index: {}]
  %s5 = inlined_call_operand.hbm [shape: f32[4,8,32], index: 5, kind: input, shape index: {}]
  %s6 = inlined_call_operand.vmem [shape: f32[1,256], index: 6, kind: input, shape index: {}]
  %s7 = inlined_call_operand.vmem [shape: f32[2,8], index: 7, kind: input, shape index: {}]
  %s8 = inlined_call_operand.vmem [shape: f32[256,32], index: 8, kind: input, shape index: {}]
  %s9 = inlined_call_operand.hbm [shape: f32[32,128], index: 9, kind: input, shape index: {}]
  %s10 = inlined_call_operand.vmem [shape: f32[1,128], index: 10, kind: input, shape index: {}]
  %s11 = inlined_call_operand.hbm [shape: f32[128,128], index: 11, kind: input, shape index: {}]
  %s12 = inlined_call_operand.vmem [shape: f32[1,128], index: 12, kind: input, shape index: {}]
  %s13 = inlined_call_operand.hbm [shape: f32[2,128], index: 13, kind: output, shape index: {}]
  %s14 = sld [smem:[#allocation0]]
  $region86: #{tpu_custom_call.1} parent=0
    _
  %s16 = ssub.s32 1, %s14
  %s17 = scalar_select 0, %s16, %s14
  $region1: #{tpu_custom_call.1} parent=0
    #allocation2 [shape = 'u8[16384]{0}', space=vmem, size = 0x4000, scoped, tag = 'input window, operand 0, single buffered']
    #allocation3 [shape = 's32[1]{0}', space=sflag, size = 0x4, scoped, tag = 'scoped memory for tpu_custom_call.1']
    #allocation4 [shape = 's32[1]{0}', space=sflag, size = 0x4, scoped, tag = 'scoped memory for tpu_custom_call.1']
    #allocation5 [shape = 'u8[16384]{0}', space=vmem, size = 0x4000, scoped, tag = 'input window, operand 1, single buffered']
    #allocation6 [shape = 's32[1]{0}', space=sflag, size = 0x4, scoped, tag = 'scoped memory for tpu_custom_call.1']
    #allocation7 [shape = 'u8[262144]{0}', space=vmem, size = 0x40000, scoped, tag = 'input window, operand 4, single buffered']
    #allocation8 [shape = 'u8[16384]{0}', space=vmem, size = 0x4000, scoped, tag = 'input window, operand 5, single buffered']
    #allocation9 [shape = 's32[1]{0}', space=sflag, size = 0x4, scoped, tag = 'scoped memory for tpu_custom_call.1']
    #allocation10 [shape = 'u8[16384]{0}', space=vmem, size = 0x4000, scoped, tag = 'input window, operand 9, single buffered']
    #allocation11 [shape = 'u8[65536]{0}', space=vmem, size = 0x10000, scoped, tag = 'input window, operand 11, single buffered']
    #allocation12 [shape = 's32[1]{0}', space=sflag, size = 0x4, scoped, tag = 'scoped memory for tpu_custom_call.1']
    #allocation13 [shape = 'u8[1024]{0}', space=vmem, size = 0x400, scoped, tag = 'output window, operand 0, single buffered']
    %18 = vsyncpa [#allocation3], 0
    %19 = vsyncpa [#allocation6], 0
    %20 = vsyncpa [#allocation9], 0
    %21 = vsyncpa [#allocation12], 0
    %22 = vsyncpa [#allocation4], 0
    // Predicated region
    $region2: #{tpu_custom_call.1} parent=1 // pred_check
      _
    $region3: #{tpu_custom_call.1} parent=1 // pred_check_branch
      %24 = sbr.rel (0) target = $region5
    $region4: #{tpu_custom_call.1} parent=1 // pred_region
      %s26 = ssub.s32 512, 512
      %27 = vsyncadd [#allocation3], %s26
      %s28 = sshll.u32 [#allocation2], 4
      %s29 = int_to_ptr.vmem [resolvable:$true] %s28
      %34 = dma.hbm_to_vmem [thread:$0]  %s0, 512, %s29, [#allocation3], 128, 128, 8
    $region5: #{tpu_custom_call.1} parent=1 // pred_fallthru
      _
    // Predicated region
    $region6: #{tpu_custom_call.1} parent=1 // pred_check
      _
    $region7: #{tpu_custom_call.1} parent=1 // pred_check_branch
      %36 = sbr.rel (0) target = $region9
    $region8: #{tpu_custom_call.1} parent=1 // pred_region
      %s38 = ssub.s32 512, 512
      %39 = vsyncadd [#allocation6], %s38
      %s40 = sshll.u32 [#allocation5], 4
      %s41 = int_to_ptr.vmem [resolvable:$true] %s40
      %46 = dma.hbm_to_vmem [thread:$0]  %s1, 512, %s41, [#allocation6], 128, 128, 8
    $region9: #{tpu_custom_call.1} parent=1 // pred_fallthru
      _
    // Predicated region
    $region10: #{tpu_custom_call.1} parent=1 // pred_check
      _
    $region11: #{tpu_custom_call.1} parent=1 // pred_check_branch
      %48 = sbr.rel (0) target = $region13
    $region12: #{tpu_custom_call.1} parent=1 // pred_region
      _
    $region13: #{tpu_custom_call.1} parent=1 // pred_fallthru
      _
    // Predicated region
    $region14: #{tpu_custom_call.1} parent=1 // pred_check
      _
    $region15: #{tpu_custom_call.1} parent=1 // pred_check_branch
      %50 = sbr.rel (0) target = $region17
    $region16: #{tpu_custom_call.1} parent=1 // pred_region
      _
    $region17: #{tpu_custom_call.1} parent=1 // pred_fallthru
      _
    // Predicated region
    $region18: #{tpu_custom_call.1} parent=1 // pred_check
      _
    $region19: #{tpu_custom_call.1} parent=1 // pred_check_branch
      %52 = sbr.rel (0) target = $region21
    $region20: #{tpu_custom_call.1} parent=1 // pred_region
      %s54 = ssub.s32 8192, 8192
      %55 = vsyncadd [#allocation6], %s54
      %s56 = sshll.u32 [#allocation7], 4
      %s57 = int_to_ptr.vmem [resolvable:$true] %s56
      %62 = dma.hbm_to_vmem [thread:$0]  %s4, 8192, %s57, [#allocation6], 1024, 1024, 64
    $region21: #{tpu_custom_call.1} parent=1 // pred_fallthru
      _
    // Predicated region
    $region22: #{tpu_custom_call.1} parent=1 // pred_check
      _
    $region23: #{tpu_custom_call.1} parent=1 // pred_check_branch
      %64 = sbr.rel (0) target = $region25
    $region24: #{tpu_custom_call.1} parent=1 // pred_region
      %s66 = ssub.s32 512, 512
      %67 = vsyncadd [#allocation9], %s66
      %s68 = sshll.u32 [#allocation8], 4
      %s69 = int_to_ptr.vmem [resolvable:$true] %s68
      %74 = dma.hbm_to_vmem [thread:$0]  %s5, 512, %s69, [#allocation9], 128, 128, 8
    $region25: #{tpu_custom_call.1} parent=1 // pred_fallthru
      _
    // Predicated region
    $region26: #{tpu_custom_call.1} parent=1 // pred_check
      _
    $region27: #{tpu_custom_call.1} parent=1 // pred_check_branch
      %76 = sbr.rel (0) target = $region29
    $region28: #{tpu_custom_call.1} parent=1 // pred_region
      _
    $region29: #{tpu_custom_call.1} parent=1 // pred_fallthru
      _
    // Predicated region
    $region30: #{tpu_custom_call.1} parent=1 // pred_check
      _
    $region31: #{tpu_custom_call.1} parent=1 // pred_check_branch
      %78 = sbr.rel (0) target = $region33
    $region32: #{tpu_custom_call.1} parent=1 // pred_region
      _
    $region33: #{tpu_custom_call.1} parent=1 // pred_fallthru
      _
    // Predicated region
    $region34: #{tpu_custom_call.1} parent=1 // pred_check
      _
    $region35: #{tpu_custom_call.1} parent=1 // pred_check_branch
      %80 = sbr.rel (0) target = $region37
    $region36: #{tpu_custom_call.1} parent=1 // pred_region
      _
    $region37: #{tpu_custom_call.1} parent=1 // pred_fallthru
      _
    // Predicated region
    $region38: #{tpu_custom_call.1} parent=1 // pred_check
      _
    $region39: #{tpu_custom_call.1} parent=1 // pred_check_branch
      %82 = sbr.rel (0) target = $region41
    $region40: #{tpu_custom_call.1} parent=1 // pred_region
      %s84 = ssub.s32 512, 512
      %85 = vsyncadd [#allocation9], %s84
      %s86 = sshll.u32 [#allocation10], 4
      %s87 = int_to_ptr.vmem [resolvable:$true] %s86
      %92 = dma.hbm_to_vmem [thread:$0]  %s9, 512, %s87, [#allocation9], 128, 128, 8
    $region41: #{tpu_custom_call.1} parent=1 // pred_fallthru
      _
    // Predicated region
    $region42: #{tpu_custom_call.1} parent=1 // pred_check
      _
    $region43: #{tpu_custom_call.1} parent=1 // pred_check_branch
      %94 = sbr.rel (0) target = $region45
    $region44: #{tpu_custom_call.1} parent=1 // pred_region
      _
    $region45: #{tpu_custom_call.1} parent=1 // pred_fallthru
      _
    // Predicated region
    $region46: #{tpu_custom_call.1} parent=1 // pred_check
      _
    $region47: #{tpu_custom_call.1} parent=1 // pred_check_branch
      %96 = sbr.rel (0) target = $region49
    $region48: #{tpu_custom_call.1} parent=1 // pred_region
      %s98 = ssub.s32 2048, 2048
      %99 = vsyncadd [#allocation12], %s98
      %s100 = sshll.u32 [#allocation11], 4
      %s101 = int_to_ptr.vmem [resolvable:$true] %s100
      %106 = dma.hbm_to_vmem [thread:$0]  %s11, 2048, %s101, [#allocation12], 128, 128, 8
    $region49: #{tpu_custom_call.1} parent=1 // pred_fallthru
      _
    // Predicated region
    $region50: #{tpu_custom_call.1} parent=1 // pred_check
      _
    $region51: #{tpu_custom_call.1} parent=1 // pred_check_branch
      %108 = sbr.rel (0) target = $region53
    $region52: #{tpu_custom_call.1} parent=1 // pred_region
      _
    $region53: #{tpu_custom_call.1} parent=1 // pred_fallthru
      _
    // Predicated region
    $region54: #{tpu_custom_call.1} parent=1 // pred_check
      _
    $region55: #{tpu_custom_call.1} parent=1 // pred_check_branch
      %110 = sbr.rel (0) target = $region57
    $region56: #{tpu_custom_call.1} parent=1 // pred_region
      %111 = dma.done [#allocation3], 512
    $region57: #{tpu_custom_call.1} parent=1 // pred_fallthru
      _
    // Predicated region
    $region58: #{tpu_custom_call.1} parent=1 // pred_check
      _
    $region59: #{tpu_custom_call.1} parent=1 // pred_check_branch
      %113 = sbr.rel (0) target = $region61
    $region60: #{tpu_custom_call.1} parent=1 // pred_region
      %114 = dma.done [#allocation6], 512
    $region61: #{tpu_custom_call.1} parent=1 // pred_fallthru
      _
    // Predicated region
    $region62: #{tpu_custom_call.1} parent=1 // pred_check
      _
    $region63: #{tpu_custom_call.1} parent=1 // pred_check_branch
      %116 = sbr.rel (0) target = $region65
    $region64: #{tpu_custom_call.1} parent=1 // pred_region
      %117 = dma.done [#allocation6], 8192
    $region65: #{tpu_custom_call.1} parent=1 // pred_fallthru
      _
    // Predicated region
    $region66: #{tpu_custom_call.1} parent=1 // pred_check
      _
    $region67: #{tpu_custom_call.1} parent=1 // pred_check_branch
      %119 = sbr.rel (0) target = $region69
    $region68: #{tpu_custom_call.1} parent=1 // pred_region
      %120 = dma.done [#allocation9], 512
    $region69: #{tpu_custom_call.1} parent=1 // pred_fallthru
      _
    // Predicated region
    $region70: #{tpu_custom_call.1} parent=1 // pred_check
      _
    $region71: #{tpu_custom_call.1} parent=1 // pred_check_branch
      %122 = sbr.rel (0) target = $region73
    $region72: #{tpu_custom_call.1} parent=1 // pred_region
      %123 = dma.done [#allocation9], 512
    $region73: #{tpu_custom_call.1} parent=1 // pred_fallthru
      _
    // Predicated region
    $region74: #{tpu_custom_call.1} parent=1 // pred_check
      _
    $region75: #{tpu_custom_call.1} parent=1 // pred_check_branch
      %125 = sbr.rel (0) target = $region77
    $region76: #{tpu_custom_call.1} parent=1 // pred_region
      %126 = dma.done [#allocation12], 2048
    $region77: #{tpu_custom_call.1} parent=1 // pred_fallthru
      _
    %v127 = vld [vmem:[#allocation2] sm:$0xff]
    %v128 = vld [vmem:[#allocation2 + $0x8] sm:$0xff]
    %v129 = vld [vmem:[#allocation2 + $0x10] sm:$0xff]
    %v130 = vld [vmem:[#allocation2 + $0x18] sm:$0xff]
    %v131 = vld [vmem:[#allocation5] sm:$0xff]
    %v132 = vld [vmem:[#allocation5 + $0x8] sm:$0xff]
    %v133 = vld [vmem:[#allocation5 + $0x10] sm:$0xff]
    %v134 = vld [vmem:[#allocation5 + $0x18] sm:$0xff]
    %v135 = vld [vmem:[%s2] sm:$0xff]
    %v136 = vld [vmem:[%s2 + $0x8] sm:$0xff]
    %v137 = vld [vmem:[%s2 + $0x10] sm:$0xff]
    %v138 = vld [vmem:[%s2 + $0x18] sm:$0xff]
    %v139 = vld [vmem:[%s2 + $0x20] sm:$0xff]
    %v140 = vld [vmem:[%s2 + $0x28] sm:$0xff]
    %v141 = vld [vmem:[%s2 + $0x30] sm:$0xff]
    %v142 = vld [vmem:[%s2 + $0x38] sm:$0xff]
    %v143 = vld [vmem:[%s2 + $0x40] sm:$0xff]
    %v144 = vld [vmem:[%s2 + $0x48] sm:$0xff]
    %v145 = vld [vmem:[%s2 + $0x50] sm:$0xff]
    %v146 = vld [vmem:[%s2 + $0x58] sm:$0xff]
    %v147 = vld [vmem:[%s2 + $0x60] sm:$0xff]
    %v148 = vld [vmem:[%s2 + $0x68] sm:$0xff]
    %v149 = vld [vmem:[%s2 + $0x70] sm:$0xff]
    %v150 = vld [vmem:[%s2 + $0x78] sm:$0xff]
    %v151 = vld [vmem:[%s2 + $0x80] sm:$0xff]
    %v152 = vld [vmem:[%s2 + $0x88] sm:$0xff]
    %v153 = vld [vmem:[%s2 + $0x90] sm:$0xff]
    %v154 = vld [vmem:[%s2 + $0x98] sm:$0xff]
    %v155 = vld [vmem:[%s2 + $0xa0] sm:$0xff]
    %v156 = vld [vmem:[%s2 + $0xa8] sm:$0xff]
    %v157 = vld [vmem:[%s2 + $0xb0] sm:$0xff]
    %v158 = vld [vmem:[%s2 + $0xb8] sm:$0xff]
    %v159 = vld [vmem:[%s2 + $0xc0] sm:$0xff]
    %v160 = vld [vmem:[%s2 + $0xc8] sm:$0xff]
    %v161 = vld [vmem:[%s2 + $0xd0] sm:$0xff]
    %v162 = vld [vmem:[%s2 + $0xd8] sm:$0xff]
    %v163 = vld [vmem:[%s2 + $0xe0] sm:$0xff]
    %v164 = vld [vmem:[%s2 + $0xe8] sm:$0xff]
    %v165 = vld [vmem:[%s2 + $0xf0] sm:$0xff]
    %v166 = vld [vmem:[%s2 + $0xf8] sm:$0xff]
    %v167 = vld [vmem:[%s2 + $0x100] sm:$0xff]
    %v168 = vld [vmem:[%s2 + $0x108] sm:$0xff]
    %v169 = vld [vmem:[%s2 + $0x110] sm:$0xff]
    %v170 = vld [vmem:[%s2 + $0x118] sm:$0xff]
    %v171 = vld [vmem:[%s2 + $0x120] sm:$0xff]
    %v172 = vld [vmem:[%s2 + $0x128] sm:$0xff]
    %v173 = vld [vmem:[%s2 + $0x130] sm:$0xff]
    %v174 = vld [vmem:[%s2 + $0x138] sm:$0xff]
    %v175 = vld [vmem:[%s2 + $0x140] sm:$0xff]
    %v176 = vld [vmem:[%s2 + $0x148] sm:$0xff]
    %v177 = vld [vmem:[%s2 + $0x150] sm:$0xff]
    %v178 = vld [vmem:[%s2 + $0x158] sm:$0xff]
    %v179 = vld [vmem:[%s2 + $0x160] sm:$0xff]
    %v180 = vld [vmem:[%s2 + $0x168] sm:$0xff]
    %v181 = vld [vmem:[%s2 + $0x170] sm:$0xff]
    %v182 = vld [vmem:[%s2 + $0x178] sm:$0xff]
    %v183 = vld [vmem:[%s2 + $0x180] sm:$0xff]
    %v184 = vld [vmem:[%s2 + $0x188] sm:$0xff]
    %v185 = vld [vmem:[%s2 + $0x190] sm:$0xff]
    %v186 = vld [vmem:[%s2 + $0x198] sm:$0xff]
    %v187 = vld [vmem:[%s2 + $0x1a0] sm:$0xff]
    %v188 = vld [vmem:[%s2 + $0x1a8] sm:$0xff]
    %v189 = vld [vmem:[%s2 + $0x1b0] sm:$0xff]
    %v190 = vld [vmem:[%s2 + $0x1b8] sm:$0xff]
    %v191 = vld [vmem:[%s2 + $0x1c0] sm:$0xff]
    %v192 = vld [vmem:[%s2 + $0x1c8] sm:$0xff]
    %v193 = vld [vmem:[%s2 + $0x1d0] sm:$0xff]
    %v194 = vld [vmem:[%s2 + $0x1d8] sm:$0xff]
    %v195 = vld [vmem:[%s2 + $0x1e0] sm:$0xff]
    %v196 = vld [vmem:[%s2 + $0x1e8] sm:$0xff]
    %v197 = vld [vmem:[%s2 + $0x1f0] sm:$0xff]
    %v198 = vld [vmem:[%s2 + $0x1f8] sm:$0xff]
    %199 = vmatprep.subr.mxu0 %v136
    %200 = vmatpush1.msra.mxu0 %v135
    %201 = vmatprep.subr.mxu0 %v138
    %202 = vmatpush1.msra.mxu0 %v137
    %203 = vmatprep.subr.mxu0 %v140
    %204 = vmatpush1.msra.mxu0 %v139
    %205 = vmatprep.subr.mxu0 %v142
    %206 = vmatpush1.msra.mxu0 %v141
    %207 = vmatprep.subr.mxu0 %v144
    %208 = vmatpush1.msra.mxu0 %v143
    %209 = vmatprep.subr.mxu0 %v146
    %210 = vmatpush1.msra.mxu0 %v145
    %211 = vmatprep.subr.mxu0 %v148
    %212 = vmatpush1.msra.mxu0 %v147
    %213 = vmatprep.subr.mxu0 %v150
    %214 = vmatpush1.msra.mxu0 %v149
    %215 = vmatprep.subr.mxu0 %v152
    %216 = vmatpush1.msra.mxu0 %v151
    %217 = vmatprep.subr.mxu0 %v154
    %218 = vmatpush1.msra.mxu0 %v153
    %219 = vmatprep.subr.mxu0 %v156
    %220 = vmatpush1.msra.mxu0 %v155
    %221 = vmatprep.subr.mxu0 %v158
    %222 = vmatpush1.msra.mxu0 %v157
    %223 = vmatprep.subr.mxu0 %v160
    %224 = vmatpush1.msra.mxu0 %v159
    %225 = vmatprep.subr.mxu0 %v162
    %226 = vmatpush1.msra.mxu0 %v161
    %227 = vmatprep.subr.mxu0 %v164
    %228 = vmatpush1.msra.mxu0 %v163
    %229 = vmatprep.subr.mxu0 %v166
    %230 = vmatpush1.msra.mxu0 %v165
    %231 = vmatprep.subr.mxu0 %v168
    %232 = vmatpush1.msra.mxu0 %v167
    %233 = vmatprep.subr.mxu0 %v170
    %234 = vmatpush1.msra.mxu0 %v169
    %235 = vmatprep.subr.mxu0 %v172
    %236 = vmatpush1.msra.mxu0 %v171
    %237 = vmatprep.subr.mxu0 %v174
    %238 = vmatpush1.msra.mxu0 %v173
    %239 = vmatprep.subr.mxu0 %v176
    %240 = vmatpush1.msra.mxu0 %v175
    %241 = vmatprep.subr.mxu0 %v178
    %242 = vmatpush1.msra.mxu0 %v177
    %243 = vmatprep.subr.mxu0 %v180
    %244 = vmatpush1.msra.mxu0 %v179
    %245 = vmatprep.subr.mxu0 %v182
    %246 = vmatpush1.msra.mxu0 %v181
    %247 = vmatprep.subr.mxu0 %v184
    %248 = vmatpush1.msra.mxu0 %v183
    %249 = vmatprep.subr.mxu0 %v186
    %250 = vmatpush1.msra.mxu0 %v185
    %251 = vmatprep.subr.mxu0 %v188
    %252 = vmatpush1.msra.mxu0 %v187
    %253 = vmatprep.subr.mxu0 %v190
    %254 = vmatpush1.msra.mxu0 %v189
    %255 = vmatprep.subr.mxu0 %v192
    %256 = vmatpush1.msra.mxu0 %v191
    %257 = vmatprep.subr.mxu0 %v194
    %258 = vmatpush1.msra.mxu0 %v193
    %259 = vmatprep.subr.mxu0 %v196
    %260 = vmatpush1.msra.mxu0 %v195
    %261 = vmatprep.subr.mxu0 %v198
    %262 = vmatpush1.msra.mxu0 %v197
    %263 = vmatprep.mubr.f32.mxu0 %v131
    %264 = vmatmul.mubr.f32.gmra.mrb[0].mxu0 %v127
    %v265 = vpop.f32.mrb[0].mxu0
    %v266 = vadd.f32 0.0, %v265
    %v267 = vpop.f32.mrb[0].mxu0
    %v268 = vadd.f32 0.0, %v267
    %269 = vmatprep.mubr.f32.mxu0 %v132
    %270 = vmatmul.mubr.f32.gmra.mrb[0].mxu0 %v128
    %v271 = vpop.f32.mrb[0].mxu0
    %v272 = vadd.f32 0.0, %v271
    %v273 = vpop.f32.mrb[0].mxu0
    %v274 = vadd.f32 0.0, %v273
    %275 = vmatprep.mubr.f32.mxu0 %v133
    %276 = vmatmul.mubr.f32.gmra.mrb[0].mxu0 %v129
    %v277 = vpop.f32.mrb[0].mxu0
    %v278 = vadd.f32 0.0, %v277
    %v279 = vpop.f32.mrb[0].mxu0
    %v280 = vadd.f32 0.0, %v279
    %281 = vmatprep.mubr.f32.mxu0 %v134
    %282 = vmatmul.mubr.f32.gmra.mrb[0].mxu0 %v130
    %v283 = vpop.f32.mrb[0].mxu0
    %v284 = vadd.f32 0.0, %v283
    %v285 = vpop.f32.mrb[0].mxu0
    %v286 = vadd.f32 0.0, %v285
    %287 = vdwg.mxu0
    %v288 = vmul.f32 %v266, %v266
    %v289 = vmul.f32 %v272, %v272
    %v290 = vmul.f32 %v278, %v278
    %v291 = vmul.f32 %v284, %v284
    %v292 = vmul.f32 %v268, %v268
    %v293 = vmul.f32 %v274, %v274
    %v294 = vmul.f32 %v280, %v280
    %v295 = vmul.f32 %v286, %v286
    %v296 = vadd.f32 %v288, %v292
    %v297 = vadd.f32 %v289, %v293
    %v298 = vadd.f32 %v290, %v294
    %v299 = vadd.f32 %v291, %v295
    %v300 = vld [vmem:[%s3] sm:$0xff]
    %v301 = vld [vmem:[%s3 + $0x8] sm:$0xff]
    %v302 = vld [vmem:[%s3 + $0x10] sm:$0xff]
    %v303 = vld [vmem:[%s3 + $0x18] sm:$0xff]
    %v304 = vld [vmem:[%s3 + $0x20] sm:$0xff]
    %v305 = vld [vmem:[%s3 + $0x28] sm:$0xff]
    %v306 = vld [vmem:[%s3 + $0x30] sm:$0xff]
    %v307 = vld [vmem:[%s3 + $0x38] sm:$0xff]
    %v308 = vld [vmem:[%s3 + $0x40] sm:$0xff]
    %v309 = vld [vmem:[%s3 + $0x48] sm:$0xff]
    %v310 = vld [vmem:[%s3 + $0x50] sm:$0xff]
    %v311 = vld [vmem:[%s3 + $0x58] sm:$0xff]
    %v312 = vld [vmem:[%s3 + $0x60] sm:$0xff]
    %v313 = vld [vmem:[%s3 + $0x68] sm:$0xff]
    %v314 = vld [vmem:[%s3 + $0x70] sm:$0xff]
    %v315 = vld [vmem:[%s3 + $0x78] sm:$0xff]
    %316 = vmatprep.subr.mxu0 0.0
    %317 = vmatpush1.msra.mxu0 %v300
    %318 = vmatprep.subr.mxu0 0.0
    %319 = vmatpush1.msra.mxu0 %v301
    %320 = vmatprep.subr.mxu0 0.0
    %321 = vmatpush1.msra.mxu0 %v302
    %322 = vmatprep.subr.mxu0 0.0
    %323 = vmatpush1.msra.mxu0 %v303
    %324 = vmatprep.subr.mxu0 0.0
    %325 = vmatpush1.msra.mxu0 %v304
    %326 = vmatprep.subr.mxu0 0.0
    %327 = vmatpush1.msra.mxu0 %v305
    %328 = vmatprep.subr.mxu0 0.0
    %329 = vmatpush1.msra.mxu0 %v306
    %330 = vmatprep.subr.mxu0 0.0
    %331 = vmatpush1.msra.mxu0 %v307
    %332 = vmatprep.subr.mxu0 0.0
    %333 = vmatpush1.msra.mxu0 %v308
    %334 = vmatprep.subr.mxu0 0.0
    %335 = vmatpush1.msra.mxu0 %v309
    %336 = vmatprep.subr.mxu0 0.0
    %337 = vmatpush1.msra.mxu0 %v310
    %338 = vmatprep.subr.mxu0 0.0
    %339 = vmatpush1.msra.mxu0 %v311
    %340 = vmatprep.subr.mxu0 0.0
    %341 = vmatpush1.msra.mxu0 %v312
    %342 = vmatprep.subr.mxu0 0.0
    %343 = vmatpush1.msra.mxu0 %v313
    %344 = vmatprep.subr.mxu0 0.0
    %345 = vmatpush1.msra.mxu0 %v314
    %346 = vmatprep.subr.mxu0 0.0
    %347 = vmatpush1.msra.mxu0 %v315
    %348 = vmatprep.subr.mxu0 0.0
    %349 = vmatpush1.msra.mxu0 0.0
    %350 = vmatprep.subr.mxu0 0.0
    %351 = vmatpush1.msra.mxu0 0.0
    %352 = vmatprep.subr.mxu0 0.0
    %353 = vmatpush1.msra.mxu0 0.0
    %354 = vmatprep.subr.mxu0 0.0
    %355 = vmatpush1.msra.mxu0 0.0
    %356 = vmatprep.subr.mxu0 0.0
    %357 = vmatpush1.msra.mxu0 0.0
    %358 = vmatprep.subr.mxu0 0.0
    %359 = vmatpush1.msra.mxu0 0.0
    %360 = vmatprep.subr.mxu0 0.0
    %361 = vmatpush1.msra.mxu0 0.0
    %362 = vmatprep.subr.mxu0 0.0
    %363 = vmatpush1.msra.mxu0 0.0
    %364 = vmatprep.subr.mxu0 0.0
    %365 = vmatpush1.msra.mxu0 0.0
    %366 = vmatprep.subr.mxu0 0.0
    %367 = vmatpush1.msra.mxu0 0.0
    %368 = vmatprep.subr.mxu0 0.0
    %369 = vmatpush1.msra.mxu0 0.0
    %370 = vmatprep.subr.mxu0 0.0
    %371 = vmatpush1.msra.mxu0 0.0
    %372 = vmatprep.subr.mxu0 0.0
    %373 = vmatpush1.msra.mxu0 0.0
    %374 = vmatprep.subr.mxu0 0.0
    %375 = vmatpush1.msra.mxu0 0.0
    %376 = vmatprep.subr.mxu0 0.0
    %377 = vmatpush1.msra.mxu0 0.0
    %378 = vmatprep.subr.mxu0 0.0
    %379 = vmatpush1.msra.mxu0 0.0
    %380 = vmatprep.mubr.f32.mxu0 0.0
    %381 = vmatmul.mubr.f32.gmra.mrb[0].mxu0 %v296
    %v382 = vpop.f32.mrb[0].mxu0
    %v383 = vadd.f32 0.0, %v382
    %v384 = vpop.f32.mrb[0].mxu0
    %385 = vmatprep.mubr.f32.mxu0 0.0
    %386 = vmatmul.mubr.f32.gmra.mrb[0].mxu0 %v297
    %v387 = vpop.f32.mrb[0].mxu0
    %v388 = vadd.f32 0.0, %v387
    %v389 = vpop.f32.mrb[0].mxu0
    %390 = vmatprep.mubr.f32.mxu0 0.0
    %391 = vmatmul.mubr.f32.gmra.mrb[0].mxu0 %v298
    %v392 = vpop.f32.mrb[0].mxu0
    %v393 = vadd.f32 0.0, %v392
    %v394 = vpop.f32.mrb[0].mxu0
    %395 = vmatprep.mubr.f32.mxu0 0.0
    %396 = vmatmul.mubr.f32.gmra.mrb[0].mxu0 %v299
    %v397 = vpop.f32.mrb[0].mxu0
    %v398 = vadd.f32 0.0, %v397
    %v399 = vpop.f32.mrb[0].mxu0
    %400 = vdwg.mxu0
    %v401 = vmax.f32 %v383, 1e-10
    %v402 = vmax.f32 %v388, 1e-10
    %v403 = vmax.f32 %v393, 1e-10
    %v404 = vmax.f32 %v398, 1e-10
    %v405 = vlog2.pop %v401
    %v406 = vmul.f32 %v405, 0.6931472
    %v407 = vlog2.pop %v402
    %v408 = vmul.f32 %v407, 0.6931472
    %v409 = vlog2.pop %v403
    %v410 = vmul.f32 %v409, 0.6931472
    %v411 = vlog2.pop %v404
    %v412 = vmul.f32 %v411, 0.6931472
    %v413 = vmul.f32 %v406, 4.3429446
    %v414 = vmul.f32 %v408, 4.3429446
    %v415 = vmul.f32 %v410, 4.3429446
    %v416 = vmul.f32 %v412, 4.3429446
    %vm417 = vcmask 523264
    %v418 = vsel %vm417, %v413, -inf
    %419 = vmax.xlane.f32.xlu0 %v418
    %v420 = vpop.xlane.xlu0 %419
    %v421 = vsel %vm417, %v414, -inf
    %422 = vmax.xlane.f32.xlu0 %v421
    %v423 = vpop.xlane.xlu0 %422
    %v424 = vmax.f32 %v420, %v423
    %v425 = vrot.slane %v424, 4
    %v426 = vmax.f32 %v424, %v425
    %v427 = vrot.slane %v426, 2
    %v428 = vmax.f32 %v426, %v427
    %v429 = vrot.slane %v428, 1
    %v430 = vmax.f32 %v428, %v429
    %v431 = vsub.f32 %v430, 80.0
    %v432 = vmax.f32 %v413, %v431
    %v433 = vmax.f32 %v414, %v431
    %v434 = vadd.f32 %v432, 80.0
    %v435 = vadd.f32 %v433, 80.0
    %v436 = vmul.f32 %v434, 0.0125
    %v437 = vmul.f32 %v435, 0.0125
    %v438 = vsel %vm417, %v415, -inf
    %439 = vmax.xlane.f32.xlu0 %v438
    %v440 = vpop.xlane.xlu0 %439
    %v441 = vsel %vm417, %v416, -inf
    %442 = vmax.xlane.f32.xlu0 %v441
    %v443 = vpop.xlane.xlu0 %442
    %v444 = vmax.f32 %v440, %v443
    %v445 = vrot.slane %v444, 4
    %v446 = vmax.f32 %v444, %v445
    %v447 = vrot.slane %v446, 2
    %v448 = vmax.f32 %v446, %v447
    %v449 = vrot.slane %v448, 1
    %v450 = vmax.f32 %v448, %v449
    %v451 = vsub.f32 %v450, 80.0
    %v452 = vmax.f32 %v415, %v451
    %v453 = vmax.f32 %v416, %v451
    %v454 = vadd.f32 %v452, 80.0
    %v455 = vadd.f32 %v453, 80.0
    %v456 = vmul.f32 %v454, 0.0125
    %v457 = vmul.f32 %v455, 0.0125
    %v458 = vld [vmem:[#allocation7] sm:$0xff]
    %v459 = vld [vmem:[#allocation7 + $0x8] sm:$0xff]
    %v460 = vld [vmem:[#allocation7 + $0x10] sm:$0xff]
    %v461 = vld [vmem:[#allocation7 + $0x18] sm:$0xff]
    %v462 = vld [vmem:[#allocation7 + $0x20] sm:$0xff]
    %v463 = vld [vmem:[#allocation7 + $0x28] sm:$0xff]
    %v464 = vld [vmem:[#allocation7 + $0x30] sm:$0xff]
    %v465 = vld [vmem:[#allocation7 + $0x38] sm:$0xff]
    %v466 = vld [vmem:[#allocation7 + $0x40] sm:$0xff]
    %v467 = vld [vmem:[#allocation7 + $0x48] sm:$0xff]
    %v468 = vld [vmem:[#allocation7 + $0x50] sm:$0xff]
    %v469 = vld [vmem:[#allocation7 + $0x58] sm:$0xff]
    %v470 = vld [vmem:[#allocation7 + $0x60] sm:$0xff]
    %v471 = vld [vmem:[#allocation7 + $0x68] sm:$0xff]
    %v472 = vld [vmem:[#allocation7 + $0x70] sm:$0xff]
    %v473 = vld [vmem:[#allocation7 + $0x78] sm:$0xff]
    %v474 = vld [vmem:[#allocation7 + $0x80] sm:$0xff]
    %v475 = vld [vmem:[#allocation7 + $0x88] sm:$0xff]
    %v476 = vld [vmem:[#allocation7 + $0x90] sm:$0xff]
    %v477 = vld [vmem:[#allocation7 + $0x98] sm:$0xff]
    %v478 = vld [vmem:[#allocation7 + $0xa0] sm:$0xff]
    %v479 = vld [vmem:[#allocation7 + $0xa8] sm:$0xff]
    %v480 = vld [vmem:[#allocation7 + $0xb0] sm:$0xff]
    %v481 = vld [vmem:[#allocation7 + $0xb8] sm:$0xff]
    %v482 = vld [vmem:[#allocation7 + $0xc0] sm:$0xff]
    %v483 = vld [vmem:[#allocation7 + $0xc8] sm:$0xff]
    %v484 = vld [vmem:[#allocation7 + $0xd0] sm:$0xff]
    %v485 = vld [vmem:[#allocation7 + $0xd8] sm:$0xff]
    %v486 = vld [vmem:[#allocation7 + $0xe0] sm:$0xff]
    %v487 = vld [vmem:[#allocation7 + $0xe8] sm:$0xff]
    %v488 = vld [vmem:[#allocation7 + $0xf0] sm:$0xff]
    %v489 = vld [vmem:[#allocation7 + $0xf8] sm:$0xff]
    %v490 = vld [vmem:[#allocation7 + $0x100] sm:$0xff]
    %v491 = vld [vmem:[#allocation7 + $0x108] sm:$0xff]
    %v492 = vld [vmem:[#allocation7 + $0x110] sm:$0xff]
    %v493 = vld [vmem:[#allocation7 + $0x118] sm:$0xff]
    %v494 = vld [vmem:[#allocation7 + $0x120] sm:$0xff]
    %v495 = vld [vmem:[#allocation7 + $0x128] sm:$0xff]
    %v496 = vld [vmem:[#allocation7 + $0x130] sm:$0xff]
    %v497 = vld [vmem:[#allocation7 + $0x138] sm:$0xff]
    %v498 = vld [vmem:[#allocation7 + $0x140] sm:$0xff]
    %v499 = vld [vmem:[#allocation7 + $0x148] sm:$0xff]
    %v500 = vld [vmem:[#allocation7 + $0x150] sm:$0xff]
    %v501 = vld [vmem:[#allocation7 + $0x158] sm:$0xff]
    %v502 = vld [vmem:[#allocation7 + $0x160] sm:$0xff]
    %v503 = vld [vmem:[#allocation7 + $0x168] sm:$0xff]
    %v504 = vld [vmem:[#allocation7 + $0x170] sm:$0xff]
    %v505 = vld [vmem:[#allocation7 + $0x178] sm:$0xff]
    %v506 = vld [vmem:[#allocation7 + $0x180] sm:$0xff]
    %v507 = vld [vmem:[#allocation7 + $0x188] sm:$0xff]
    %v508 = vld [vmem:[#allocation7 + $0x190] sm:$0xff]
    %v509 = vld [vmem:[#allocation7 + $0x198] sm:$0xff]
    %v510 = vld [vmem:[#allocation7 + $0x1a0] sm:$0xff]
    %v511 = vld [vmem:[#allocation7 + $0x1a8] sm:$0xff]
    %v512 = vld [vmem:[#allocation7 + $0x1b0] sm:$0xff]
    %v513 = vld [vmem:[#allocation7 + $0x1b8] sm:$0xff]
    %v514 = vld [vmem:[#allocation7 + $0x1c0] sm:$0xff]
    %v515 = vld [vmem:[#allocation7 + $0x1c8] sm:$0xff]
    %v516 = vld [vmem:[#allocation7 + $0x1d0] sm:$0xff]
    %v517 = vld [vmem:[#allocation7 + $0x1d8] sm:$0xff]
    %v518 = vld [vmem:[#allocation7 + $0x1e0] sm:$0xff]
    %v519 = vld [vmem:[#allocation7 + $0x1e8] sm:$0xff]
    %v520 = vld [vmem:[#allocation7 + $0x1f0] sm:$0xff]
    %v521 = vld [vmem:[#allocation7 + $0x1f8] sm:$0xff]
    %v523 = vsel %vm417, %v436, 0
    %v526 = vsel %vm417, %v437, 0
    %v529 = vsel %vm417, %v456, 0
    %v532 = vsel %vm417, %v457, 0
    %534 = vmatprep.subr.mxu0 %v459
    %535 = vmatpush1.msra.mxu0 %v458
    %536 = vmatprep.subr.mxu0 %v467
    %537 = vmatpush1.msra.mxu0 %v466
    %538 = vmatprep.subr.mxu0 %v475
    %539 = vmatpush1.msra.mxu0 %v474
    %540 = vmatprep.subr.mxu0 %v483
    %541 = vmatpush1.msra.mxu0 %v482
    %542 = vmatprep.subr.mxu0 %v491
    %543 = vmatpush1.msra.mxu0 %v490
    %544 = vmatprep.subr.mxu0 %v499
    %545 = vmatpush1.msra.mxu0 %v498
    %546 = vmatprep.subr.mxu0 %v507
    %547 = vmatpush1.msra.mxu0 %v506
    %548 = vmatprep.subr.mxu0 %v515
    %549 = vmatpush1.msra.mxu0 %v514
    %550 = vmatprep.subr.mxu0 0.0
    %551 = vmatpush1.msra.mxu0 0.0
    %552 = vmatprep.subr.mxu0 0.0
    %553 = vmatpush1.msra.mxu0 0.0
    %554 = vmatprep.subr.mxu0 0.0
    %555 = vmatpush1.msra.mxu0 0.0
    %556 = vmatprep.subr.mxu0 0.0
    %557 = vmatpush1.msra.mxu0 0.0
    %558 = vmatprep.subr.mxu0 0.0
    %559 = vmatpush1.msra.mxu0 0.0
    %560 = vmatprep.subr.mxu0 0.0
    %561 = vmatpush1.msra.mxu0 0.0
    %562 = vmatprep.subr.mxu0 0.0
    %563 = vmatpush1.msra.mxu0 0.0
    %564 = vmatprep.subr.mxu0 0.0
    %565 = vmatpush1.msra.mxu0 0.0
    %566 = vmatprep.subr.mxu0 0.0
    %567 = vmatpush1.msra.mxu0 0.0
    %568 = vmatprep.subr.mxu0 0.0
    %569 = vmatpush1.msra.mxu0 0.0
    %570 = vmatprep.subr.mxu0 0.0
    %571 = vmatpush1.msra.mxu0 0.0
    %572 = vmatprep.subr.mxu0 0.0
    %573 = vmatpush1.msra.mxu0 0.0
    %574 = vmatprep.subr.mxu0 0.0
    %575 = vmatpush1.msra.mxu0 0.0
    %576 = vmatprep.subr.mxu0 0.0
    %577 = vmatpush1.msra.mxu0 0.0
    %578 = vmatprep.subr.mxu0 0.0
    %579 = vmatpush1.msra.mxu0 0.0
    %580 = vmatprep.subr.mxu0 0.0
    %581 = vmatpush1.msra.mxu0 0.0
    %582 = vmatprep.subr.mxu0 0.0
    %583 = vmatpush1.msra.mxu0 0.0
    %584 = vmatprep.subr.mxu0 0.0
    %585 = vmatpush1.msra.mxu0 0.0
    %586 = vmatprep.subr.mxu0 0.0
    %587 = vmatpush1.msra.mxu0 0.0
    %588 = vmatprep.subr.mxu0 0.0
    %589 = vmatpush1.msra.mxu0 0.0
    %590 = vmatprep.subr.mxu0 0.0
    %591 = vmatpush1.msra.mxu0 0.0
    %592 = vmatprep.subr.mxu0 0.0
    %593 = vmatpush1.msra.mxu0 0.0
    %594 = vmatprep.subr.mxu0 0.0
    %595 = vmatpush1.msra.mxu0 0.0
    %596 = vmatprep.subr.mxu0 0.0
    %597 = vmatpush1.msra.mxu0 0.0
    %598 = vmatprep.mubr.f32.mxu0 0.0
    %599 = vmatmul.mubr.f32.gmra.mrb[0].mxu0 %v523
    %v600 = vpop.f32.mrb[0].mxu0
    %v601 = vadd.f32 0.0, %v600
    %v602 = vpop.f32.mrb[0].mxu0
    %v603 = vadd.f32 0.0, %v602
    %604 = vmatprep.mubr.f32.mxu0 0.0
    %605 = vmatmul.mubr.f32.gmra.mrb[0].mxu0 %v526
    %v606 = vpop.f32.mrb[0].mxu0
    %v607 = vadd.f32 0.0, %v606
    %v608 = vpop.f32.mrb[0].mxu0
    %v609 = vadd.f32 0.0, %v608
    %610 = vmatprep.mubr.f32.mxu0 0.0
    %611 = vmatmul.mubr.f32.gmra.mrb[0].mxu0 %v529
    %v612 = vpop.f32.mrb[0].mxu0
    %v613 = vadd.f32 0.0, %v612
    %v614 = vpop.f32.mrb[0].mxu0
    %v615 = vadd.f32 0.0, %v614
    %616 = vmatprep.mubr.f32.mxu0 0.0
    %617 = vmatmul.mubr.f32.gmra.mrb[0].mxu0 %v532
    %v618 = vpop.f32.mrb[0].mxu0
    %v619 = vadd.f32 0.0, %v618
    %v620 = vpop.f32.mrb[0].mxu0
    %v621 = vadd.f32 0.0, %v620
    %622 = vdwg.mxu0
    %623 = vmatprep.subr.mxu0 %v461
    %624 = vmatpush1.msra.mxu0 %v460
    %625 = vmatprep.subr.mxu0 %v469
    %626 = vmatpush1.msra.mxu0 %v468
    %627 = vmatprep.subr.mxu0 %v477
    %628 = vmatpush1.msra.mxu0 %v476
    %629 = vmatprep.subr.mxu0 %v485
    %630 = vmatpush1.msra.mxu0 %v484
    %631 = vmatprep.subr.mxu0 %v493
    %632 = vmatpush1.msra.mxu0 %v492
    %633 = vmatprep.subr.mxu0 %v501
    %634 = vmatpush1.msra.mxu0 %v500
    %635 = vmatprep.subr.mxu0 %v509
    %636 = vmatpush1.msra.mxu0 %v508
    %637 = vmatprep.subr.mxu0 %v517
    %638 = vmatpush1.msra.mxu0 %v516
    %639 = vmatprep.subr.mxu0 0.0
    %640 = vmatpush1.msra.mxu0 0.0
    %641 = vmatprep.subr.mxu0 0.0
    %642 = vmatpush1.msra.mxu0 0.0
    %643 = vmatprep.subr.mxu0 0.0
    %644 = vmatpush1.msra.mxu0 0.0
    %645 = vmatprep.subr.mxu0 0.0
    %646 = vmatpush1.msra.mxu0 0.0
    %647 = vmatprep.subr.mxu0 0.0
    %648 = vmatpush1.msra.mxu0 0.0
    %649 = vmatprep.subr.mxu0 0.0
    %650 = vmatpush1.msra.mxu0 0.0
    %651 = vmatprep.subr.mxu0 0.0
    %652 = vmatpush1.msra.mxu0 0.0
    %653 = vmatprep.subr.mxu0 0.0
    %654 = vmatpush1.msra.mxu0 0.0
    %655 = vmatprep.subr.mxu0 0.0
    %656 = vmatpush1.msra.mxu0 0.0
    %657 = vmatprep.subr.mxu0 0.0
    %658 = vmatpush1.msra.mxu0 0.0
    %659 = vmatprep.subr.mxu0 0.0
    %660 = vmatpush1.msra.mxu0 0.0
    %661 = vmatprep.subr.mxu0 0.0
    %662 = vmatpush1.msra.mxu0 0.0
    %663 = vmatprep.subr.mxu0 0.0
    %664 = vmatpush1.msra.mxu0 0.0
    %665 = vmatprep.subr.mxu0 0.0
    %666 = vmatpush1.msra.mxu0 0.0
    %667 = vmatprep.subr.mxu0 0.0
    %668 = vmatpush1.msra.mxu0 0.0
    %669 = vmatprep.subr.mxu0 0.0
    %670 = vmatpush1.msra.mxu0 0.0
    %671 = vmatprep.subr.mxu0 0.0
    %672 = vmatpush1.msra.mxu0 0.0
    %673 = vmatprep.subr.mxu0 0.0
    %674 = vmatpush1.msra.mxu0 0.0
    %675 = vmatprep.subr.mxu0 0.0
    %676 = vmatpush1.msra.mxu0 0.0
    %677 = vmatprep.subr.mxu0 0.0
    %678 = vmatpush1.msra.mxu0 0.0
    %679 = vmatprep.subr.mxu0 0.0
    %680 = vmatpush1.msra.mxu0 0.0
    %681 = vmatprep.subr.mxu0 0.0
    %682 = vmatpush1.msra.mxu0 0.0
    %683 = vmatprep.subr.mxu0 0.0
    %684 = vmatpush1.msra.mxu0 0.0
    %685 = vmatprep.subr.mxu0 0.0
    %686 = vmatpush1.msra.mxu0 0.0
    %687 = vmatprep.mubr.f32.mxu0 0.0
    %688 = vmatmul.mubr.f32.gmra.mrb[0].mxu0 %v523
    %v689 = vpop.f32.mrb[0].mxu0
    %v690 = vadd.f32 0.0, %v689
    %v691 = vpop.f32.mrb[0].mxu0
    %v692 = vadd.f32 0.0, %v691
    %693 = vmatprep.mubr.f32.mxu0 0.0
    %694 = vmatmul.mubr.f32.gmra.mrb[0].mxu0 %v526
    %v695 = vpop.f32.mrb[0].mxu0
    %v696 = vadd.f32 0.0, %v695
    %v697 = vpop.f32.mrb[0].mxu0
    %v698 = vadd.f32 0.0, %v697
    %699 = vmatprep.mubr.f32.mxu0 0.0
    %700 = vmatmul.mubr.f32.gmra.mrb[0].mxu0 %v529
    %v701 = vpop.f32.mrb[0].mxu0
    %v702 = vadd.f32 0.0, %v701
    %v703 = vpop.f32.mrb[0].mxu0
    %v704 = vadd.f32 0.0, %v703
    %705 = vmatprep.mubr.f32.mxu0 0.0
    %706 = vmatmul.mubr.f32.gmra.mrb[0].mxu0 %v532
    %v707 = vpop.f32.mrb[0].mxu0
    %v708 = vadd.f32 0.0, %v707
    %v709 = vpop.f32.mrb[0].mxu0
    %v710 = vadd.f32 0.0, %v709
    %711 = vdwg.mxu0
    %712 = vmatprep.subr.mxu0 %v463
    %713 = vmatpush1.msra.mxu0 %v462
    %714 = vmatprep.subr.mxu0 %v471
    %715 = vmatpush1.msra.mxu0 %v470
    %716 = vmatprep.subr.mxu0 %v479
    %717 = vmatpush1.msra.mxu0 %v478
    %718 = vmatprep.subr.mxu0 %v487
    %719 = vmatpush1.msra.mxu0 %v486
    %720 = vmatprep.subr.mxu0 %v495
    %721 = vmatpush1.msra.mxu0 %v494
    %722 = vmatprep.subr.mxu0 %v503
    %723 = vmatpush1.msra.mxu0 %v502
    %724 = vmatprep.subr.mxu0 %v511
    %725 = vmatpush1.msra.mxu0 %v510
    %726 = vmatprep.subr.mxu0 %v519
    %727 = vmatpush1.msra.mxu0 %v518
    %728 = vmatprep.subr.mxu0 0.0
    %729 = vmatpush1.msra.mxu0 0.0
    %730 = vmatprep.subr.mxu0 0.0
    %731 = vmatpush1.msra.mxu0 0.0
    %732 = vmatprep.subr.mxu0 0.0
    %733 = vmatpush1.msra.mxu0 0.0
    %734 = vmatprep.subr.mxu0 0.0
    %735 = vmatpush1.msra.mxu0 0.0
    %736 = vmatprep.subr.mxu0 0.0
    %737 = vmatpush1.msra.mxu0 0.0
    %738 = vmatprep.subr.mxu0 0.0
    %739 = vmatpush1.msra.mxu0 0.0
    %740 = vmatprep.subr.mxu0 0.0
    %741 = vmatpush1.msra.mxu0 0.0
    %742 = vmatprep.subr.mxu0 0.0
    %743 = vmatpush1.msra.mxu0 0.0
    %744 = vmatprep.subr.mxu0 0.0
    %745 = vmatpush1.msra.mxu0 0.0
    %746 = vmatprep.subr.mxu0 0.0
    %747 = vmatpush1.msra.mxu0 0.0
    %748 = vmatprep.subr.mxu0 0.0
    %749 = vmatpush1.msra.mxu0 0.0
    %750 = vmatprep.subr.mxu0 0.0
    %751 = vmatpush1.msra.mxu0 0.0
    %752 = vmatprep.subr.mxu0 0.0
    %753 = vmatpush1.msra.mxu0 0.0
    %754 = vmatprep.subr.mxu0 0.0
    %755 = vmatpush1.msra.mxu0 0.0
    %756 = vmatprep.subr.mxu0 0.0
    %757 = vmatpush1.msra.mxu0 0.0
    %758 = vmatprep.subr.mxu0 0.0
    %759 = vmatpush1.msra.mxu0 0.0
    %760 = vmatprep.subr.mxu0 0.0
    %761 = vmatpush1.msra.mxu0 0.0
    %762 = vmatprep.subr.mxu0 0.0
    %763 = vmatpush1.msra.mxu0 0.0
    %764 = vmatprep.subr.mxu0 0.0
    %765 = vmatpush1.msra.mxu0 0.0
    %766 = vmatprep.subr.mxu0 0.0
    %767 = vmatpush1.msra.mxu0 0.0
    %768 = vmatprep.subr.mxu0 0.0
    %769 = vmatpush1.msra.mxu0 0.0
    %770 = vmatprep.subr.mxu0 0.0
    %771 = vmatpush1.msra.mxu0 0.0
    %772 = vmatprep.subr.mxu0 0.0
    %773 = vmatpush1.msra.mxu0 0.0
    %774 = vmatprep.subr.mxu0 0.0
    %775 = vmatpush1.msra.mxu0 0.0
    %776 = vmatprep.mubr.f32.mxu0 0.0
    %777 = vmatmul.mubr.f32.gmra.mrb[0].mxu0 %v523
    %v778 = vpop.f32.mrb[0].mxu0
    %v779 = vadd.f32 0.0, %v778
    %v780 = vpop.f32.mrb[0].mxu0
    %v781 = vadd.f32 0.0, %v780
    %782 = vmatprep.mubr.f32.mxu0 0.0
    %783 = vmatmul.mubr.f32.gmra.mrb[0].mxu0 %v526
    %v784 = vpop.f32.mrb[0].mxu0
    %v785 = vadd.f32 0.0, %v784
    %v786 = vpop.f32.mrb[0].mxu0
    %v787 = vadd.f32 0.0, %v786
    %788 = vmatprep.mubr.f32.mxu0 0.0
    %789 = vmatmul.mubr.f32.gmra.mrb[0].mxu0 %v529
    %v790 = vpop.f32.mrb[0].mxu0
    %v791 = vadd.f32 0.0, %v790
    %v792 = vpop.f32.mrb[0].mxu0
    %v793 = vadd.f32 0.0, %v792
    %794 = vmatprep.mubr.f32.mxu0 0.0
    %795 = vmatmul.mubr.f32.gmra.mrb[0].mxu0 %v532
    %v796 = vpop.f32.mrb[0].mxu0
    %v797 = vadd.f32 0.0, %v796
    %v798 = vpop.f32.mrb[0].mxu0
    %v799 = vadd.f32 0.0, %v798
    %800 = vdwg.mxu0
    %801 = vmatprep.subr.mxu0 %v465
    %802 = vmatpush1.msra.mxu0 %v464
    %803 = vmatprep.subr.mxu0 %v473
    %804 = vmatpush1.msra.mxu0 %v472
    %805 = vmatprep.subr.mxu0 %v481
    %806 = vmatpush1.msra.mxu0 %v480
    %807 = vmatprep.subr.mxu0 %v489
    %808 = vmatpush1.msra.mxu0 %v488
    %809 = vmatprep.subr.mxu0 %v497
    %810 = vmatpush1.msra.mxu0 %v496
    %811 = vmatprep.subr.mxu0 %v505
    %812 = vmatpush1.msra.mxu0 %v504
    %813 = vmatprep.subr.mxu0 %v513
    %814 = vmatpush1.msra.mxu0 %v512
    %815 = vmatprep.subr.mxu0 %v521
    %816 = vmatpush1.msra.mxu0 %v520
    %817 = vmatprep.subr.mxu0 0.0
    %818 = vmatpush1.msra.mxu0 0.0
    %819 = vmatprep.subr.mxu0 0.0
    %820 = vmatpush1.msra.mxu0 0.0
    %821 = vmatprep.subr.mxu0 0.0
    %822 = vmatpush1.msra.mxu0 0.0
    %823 = vmatprep.subr.mxu0 0.0
    %824 = vmatpush1.msra.mxu0 0.0
    %825 = vmatprep.subr.mxu0 0.0
    %826 = vmatpush1.msra.mxu0 0.0
    %827 = vmatprep.subr.mxu0 0.0
    %828 = vmatpush1.msra.mxu0 0.0
    %829 = vmatprep.subr.mxu0 0.0
    %830 = vmatpush1.msra.mxu0 0.0
    %831 = vmatprep.subr.mxu0 0.0
    %832 = vmatpush1.msra.mxu0 0.0
    %833 = vmatprep.subr.mxu0 0.0
    %834 = vmatpush1.msra.mxu0 0.0
    %835 = vmatprep.subr.mxu0 0.0
    %836 = vmatpush1.msra.mxu0 0.0
    %837 = vmatprep.subr.mxu0 0.0
    %838 = vmatpush1.msra.mxu0 0.0
    %839 = vmatprep.subr.mxu0 0.0
    %840 = vmatpush1.msra.mxu0 0.0
    %841 = vmatprep.subr.mxu0 0.0
    %842 = vmatpush1.msra.mxu0 0.0
    %843 = vmatprep.subr.mxu0 0.0
    %844 = vmatpush1.msra.mxu0 0.0
    %845 = vmatprep.subr.mxu0 0.0
    %846 = vmatpush1.msra.mxu0 0.0
    %847 = vmatprep.subr.mxu0 0.0
    %848 = vmatpush1.msra.mxu0 0.0
    %849 = vmatprep.subr.mxu0 0.0
    %850 = vmatpush1.msra.mxu0 0.0
    %851 = vmatprep.subr.mxu0 0.0
    %852 = vmatpush1.msra.mxu0 0.0
    %853 = vmatprep.subr.mxu0 0.0
    %854 = vmatpush1.msra.mxu0 0.0
    %855 = vmatprep.subr.mxu0 0.0
    %856 = vmatpush1.msra.mxu0 0.0
    %857 = vmatprep.subr.mxu0 0.0
    %858 = vmatpush1.msra.mxu0 0.0
    %859 = vmatprep.subr.mxu0 0.0
    %860 = vmatpush1.msra.mxu0 0.0
    %861 = vmatprep.subr.mxu0 0.0
    %862 = vmatpush1.msra.mxu0 0.0
    %863 = vmatprep.subr.mxu0 0.0
    %864 = vmatpush1.msra.mxu0 0.0
    %865 = vmatprep.mubr.f32.mxu0 0.0
    %866 = vmatmul.mubr.f32.gmra.mrb[0].mxu0 %v523
    %v867 = vpop.f32.mrb[0].mxu0
    %v868 = vadd.f32 0.0, %v867
    %v869 = vpop.f32.mrb[0].mxu0
    %v870 = vadd.f32 0.0, %v869
    %871 = vmatprep.mubr.f32.mxu0 0.0
    %872 = vmatmul.mubr.f32.gmra.mrb[0].mxu0 %v526
    %v873 = vpop.f32.mrb[0].mxu0
    %v874 = vadd.f32 0.0, %v873
    %v875 = vpop.f32.mrb[0].mxu0
    %v876 = vadd.f32 0.0, %v875
    %877 = vmatprep.mubr.f32.mxu0 0.0
    %878 = vmatmul.mubr.f32.gmra.mrb[0].mxu0 %v529
    %v879 = vpop.f32.mrb[0].mxu0
    %v880 = vadd.f32 0.0, %v879
    %v881 = vpop.f32.mrb[0].mxu0
    %v882 = vadd.f32 0.0, %v881
    %883 = vmatprep.mubr.f32.mxu0 0.0
    %884 = vmatmul.mubr.f32.gmra.mrb[0].mxu0 %v532
    %v885 = vpop.f32.mrb[0].mxu0
    %v886 = vadd.f32 0.0, %v885
    %v887 = vpop.f32.mrb[0].mxu0
    %v888 = vadd.f32 0.0, %v887
    %889 = vdwg.mxu0
    %v890 = vld [vmem:[#allocation8] sm:$0xff]
    %s891 = scalar_lea.vmem [#allocation8], 8
    %v892 = vld [vmem:[%s891] sm:$0xff]
    %vm893 = vcmask 261120
    %v895 = vsel %vm893, %v892, 0
    %897 = vmatprep.subr.mxu0 %v692
    %898 = vmatpush1.msra.mxu0 %v690
    %899 = vmatprep.subr.mxu0 %v698
    %900 = vmatpush1.msra.mxu0 %v696
    %901 = vmatprep.subr.mxu0 %v704
    %902 = vmatpush1.msra.mxu0 %v702
    %903 = vmatprep.subr.mxu0 %v710
    %904 = vmatpush1.msra.mxu0 %v708
    %905 = vmatprep.subr.mxu0 0.0
    %906 = vmatpush1.msra.mxu0 0.0
    %907 = vmatprep.subr.mxu0 0.0
    %908 = vmatpush1.msra.mxu0 0.0
    %909 = vmatprep.subr.mxu0 0.0
    %910 = vmatpush1.msra.mxu0 0.0
    %911 = vmatprep.subr.mxu0 0.0
    %912 = vmatpush1.msra.mxu0 0.0
    %913 = vmatprep.subr.mxu0 0.0
    %914 = vmatpush1.msra.mxu0 0.0
    %915 = vmatprep.subr.mxu0 0.0
    %916 = vmatpush1.msra.mxu0 0.0
    %917 = vmatprep.subr.mxu0 0.0
    %918 = vmatpush1.msra.mxu0 0.0
    %919 = vmatprep.subr.mxu0 0.0
    %920 = vmatpush1.msra.mxu0 0.0
    %921 = vmatprep.subr.mxu0 0.0
    %922 = vmatpush1.msra.mxu0 0.0
    %923 = vmatprep.subr.mxu0 0.0
    %924 = vmatpush1.msra.mxu0 0.0
    %925 = vmatprep.subr.mxu0 0.0
    %926 = vmatpush1.msra.mxu0 0.0
    %927 = vmatprep.subr.mxu0 0.0
    %928 = vmatpush1.msra.mxu0 0.0
    %929 = vmatprep.subr.mxu0 0.0
    %930 = vmatpush1.msra.mxu0 0.0
    %931 = vmatprep.subr.mxu0 0.0
    %932 = vmatpush1.msra.mxu0 0.0
    %933 = vmatprep.subr.mxu0 0.0
    %934 = vmatpush1.msra.mxu0 0.0
    %935 = vmatprep.subr.mxu0 0.0
    %936 = vmatpush1.msra.mxu0 0.0
    %937 = vmatprep.subr.mxu0 0.0
    %938 = vmatpush1.msra.mxu0 0.0
    %939 = vmatprep.subr.mxu0 0.0
    %940 = vmatpush1.msra.mxu0 0.0
    %941 = vmatprep.subr.mxu0 0.0
    %942 = vmatpush1.msra.mxu0 0.0
    %943 = vmatprep.subr.mxu0 0.0
    %944 = vmatpush1.msra.mxu0 0.0
    %945 = vmatprep.subr.mxu0 0.0
    %946 = vmatpush1.msra.mxu0 0.0
    %947 = vmatprep.subr.mxu0 0.0
    %948 = vmatpush1.msra.mxu0 0.0
    %949 = vmatprep.subr.mxu0 0.0
    %950 = vmatpush1.msra.mxu0 0.0
    %951 = vmatprep.subr.mxu0 0.0
    %952 = vmatpush1.msra.mxu0 0.0
    %953 = vmatprep.subr.mxu0 0.0
    %954 = vmatpush1.msra.mxu0 0.0
    %955 = vmatprep.subr.mxu0 0.0
    %956 = vmatpush1.msra.mxu0 0.0
    %957 = vmatprep.subr.mxu0 0.0
    %958 = vmatpush1.msra.mxu0 0.0
    %959 = vmatprep.subr.mxu0 0.0
    %960 = vmatpush1.msra.mxu0 0.0
    %961 = vmatprep.mubr.f32.mxu0 0.0
    %962 = vmatmul.mubr.f32.gmra.mrb[0].mxu0 %v895
    %v963 = vpop.f32.mrb[0].mxu0
    %v964 = vadd.f32 0.0, %v963
    %v965 = vpop.f32.mrb[0].mxu0
    %v966 = vadd.f32 0.0, %v965
    %967 = vdwg.mxu0
    %v969 = vsel %vm893, %v890, 0
    %971 = vmatprep.subr.mxu0 %v603
    %972 = vmatpush1.msra.mxu0 %v601
    %973 = vmatprep.subr.mxu0 %v609
    %974 = vmatpush1.msra.mxu0 %v607
    %975 = vmatprep.subr.mxu0 %v615
    %976 = vmatpush1.msra.mxu0 %v613
    %977 = vmatprep.subr.mxu0 %v621
    %978 = vmatpush1.msra.mxu0 %v619
    %979 = vmatprep.subr.mxu0 0.0
    %980 = vmatpush1.msra.mxu0 0.0
    %981 = vmatprep.subr.mxu0 0.0
    %982 = vmatpush1.msra.mxu0 0.0
    %983 = vmatprep.subr.mxu0 0.0
    %984 = vmatpush1.msra.mxu0 0.0
    %985 = vmatprep.subr.mxu0 0.0
    %986 = vmatpush1.msra.mxu0 0.0
    %987 = vmatprep.subr.mxu0 0.0
    %988 = vmatpush1.msra.mxu0 0.0
    %989 = vmatprep.subr.mxu0 0.0
    %990 = vmatpush1.msra.mxu0 0.0
    %991 = vmatprep.subr.mxu0 0.0
    %992 = vmatpush1.msra.mxu0 0.0
    %993 = vmatprep.subr.mxu0 0.0
    %994 = vmatpush1.msra.mxu0 0.0
    %995 = vmatprep.subr.mxu0 0.0
    %996 = vmatpush1.msra.mxu0 0.0
    %997 = vmatprep.subr.mxu0 0.0
    %998 = vmatpush1.msra.mxu0 0.0
    %999 = vmatprep.subr.mxu0 0.0
    %1000 = vmatpush1.msra.mxu0 0.0
    %1001 = vmatprep.subr.mxu0 0.0
    %1002 = vmatpush1.msra.mxu0 0.0
    %1003 = vmatprep.subr.mxu0 0.0
    %1004 = vmatpush1.msra.mxu0 0.0
    %1005 = vmatprep.subr.mxu0 0.0
    %1006 = vmatpush1.msra.mxu0 0.0
    %1007 = vmatprep.subr.mxu0 0.0
    %1008 = vmatpush1.msra.mxu0 0.0
    %1009 = vmatprep.subr.mxu0 0.0
    %1010 = vmatpush1.msra.mxu0 0.0
    %1011 = vmatprep.subr.mxu0 0.0
    %1012 = vmatpush1.msra.mxu0 0.0
    %1013 = vmatprep.subr.mxu0 0.0
    %1014 = vmatpush1.msra.mxu0 0.0
    %1015 = vmatprep.subr.mxu0 0.0
    %1016 = vmatpush1.msra.mxu0 0.0
    %1017 = vmatprep.subr.mxu0 0.0
    %1018 = vmatpush1.msra.mxu0 0.0
    %1019 = vmatprep.subr.mxu0 0.0
    %1020 = vmatpush1.msra.mxu0 0.0
    %1021 = vmatprep.subr.mxu0 0.0
    %1022 = vmatpush1.msra.mxu0 0.0
    %1023 = vmatprep.subr.mxu0 0.0
    %1024 = vmatpush1.msra.mxu0 0.0
    %1025 = vmatprep.subr.mxu0 0.0
    %1026 = vmatpush1.msra.mxu0 0.0
    %1027 = vmatprep.subr.mxu0 0.0
    %1028 = vmatpush1.msra.mxu0 0.0
    %1029 = vmatprep.subr.mxu0 0.0
    %1030 = vmatpush1.msra.mxu0 0.0
    %1031 = vmatprep.subr.mxu0 0.0
    %1032 = vmatpush1.msra.mxu0 0.0
    %1033 = vmatprep.subr.mxu0 0.0
    %1034 = vmatpush1.msra.mxu0 0.0
    %1035 = vmatprep.mubr.f32.mxu0 0.0
    %1036 = vmatmul.mubr.f32.gmra.mrb[0].mxu0 %v969
    %v1037 = vpop.f32.mrb[0].mxu0
    %v1038 = vadd.f32 %v964, %v1037
    %v1039 = vpop.f32.mrb[0].mxu0
    %v1040 = vadd.f32 %v966, %v1039
    %1041 = vdwg.mxu0
    %s1042 = scalar_lea.vmem [#allocation8], 16
    %v1043 = vld [vmem:[%s1042] sm:$0xff]
    %v1045 = vsel %vm893, %v1043, 0
    %1047 = vmatprep.subr.mxu0 %v781
    %1048 = vmatpush1.msra.mxu0 %v779
    %1049 = vmatprep.subr.mxu0 %v787
    %1050 = vmatpush1.msra.mxu0 %v785
    %1051 = vmatprep.subr.mxu0 %v793
    %1052 = vmatpush1.msra.mxu0 %v791
    %1053 = vmatprep.subr.mxu0 %v799
    %1054 = vmatpush1.msra.mxu0 %v797
    %1055 = vmatprep.subr.mxu0 0.0
    %1056 = vmatpush1.msra.mxu0 0.0
    %1057 = vmatprep.subr.mxu0 0.0
    %1058 = vmatpush1.msra.mxu0 0.0
    %1059 = vmatprep.subr.mxu0 0.0
    %1060 = vmatpush1.msra.mxu0 0.0
    %1061 = vmatprep.subr.mxu0 0.0
    %1062 = vmatpush1.msra.mxu0 0.0
    %1063 = vmatprep.subr.mxu0 0.0
    %1064 = vmatpush1.msra.mxu0 0.0
    %1065 = vmatprep.subr.mxu0 0.0
    %1066 = vmatpush1.msra.mxu0 0.0
    %1067 = vmatprep.subr.mxu0 0.0
    %1068 = vmatpush1.msra.mxu0 0.0
    %1069 = vmatprep.subr.mxu0 0.0
    %1070 = vmatpush1.msra.mxu0 0.0
    %1071 = vmatprep.subr.mxu0 0.0
    %1072 = vmatpush1.msra.mxu0 0.0
    %1073 = vmatprep.subr.mxu0 0.0
    %1074 = vmatpush1.msra.mxu0 0.0
    %1075 = vmatprep.subr.mxu0 0.0
    %1076 = vmatpush1.msra.mxu0 0.0
    %1077 = vmatprep.subr.mxu0 0.0
    %1078 = vmatpush1.msra.mxu0 0.0
    %1079 = vmatprep.subr.mxu0 0.0
    %1080 = vmatpush1.msra.mxu0 0.0
    %1081 = vmatprep.subr.mxu0 0.0
    %1082 = vmatpush1.msra.mxu0 0.0
    %1083 = vmatprep.subr.mxu0 0.0
    %1084 = vmatpush1.msra.mxu0 0.0
    %1085 = vmatprep.subr.mxu0 0.0
    %1086 = vmatpush1.msra.mxu0 0.0
    %1087 = vmatprep.subr.mxu0 0.0
    %1088 = vmatpush1.msra.mxu0 0.0
    %1089 = vmatprep.subr.mxu0 0.0
    %1090 = vmatpush1.msra.mxu0 0.0
    %1091 = vmatprep.subr.mxu0 0.0
    %1092 = vmatpush1.msra.mxu0 0.0
    %1093 = vmatprep.subr.mxu0 0.0
    %1094 = vmatpush1.msra.mxu0 0.0
    %1095 = vmatprep.subr.mxu0 0.0
    %1096 = vmatpush1.msra.mxu0 0.0
    %1097 = vmatprep.subr.mxu0 0.0
    %1098 = vmatpush1.msra.mxu0 0.0
    %1099 = vmatprep.subr.mxu0 0.0
    %1100 = vmatpush1.msra.mxu0 0.0
    %1101 = vmatprep.subr.mxu0 0.0
    %1102 = vmatpush1.msra.mxu0 0.0
    %1103 = vmatprep.subr.mxu0 0.0
    %1104 = vmatpush1.msra.mxu0 0.0
    %1105 = vmatprep.subr.mxu0 0.0
    %1106 = vmatpush1.msra.mxu0 0.0
    %1107 = vmatprep.subr.mxu0 0.0
    %1108 = vmatpush1.msra.mxu0 0.0
    %1109 = vmatprep.subr.mxu0 0.0
    %1110 = vmatpush1.msra.mxu0 0.0
    %1111 = vmatprep.mubr.f32.mxu0 0.0
    %1112 = vmatmul.mubr.f32.gmra.mrb[0].mxu0 %v1045
    %v1113 = vpop.f32.mrb[0].mxu0
    %v1114 = vadd.f32 0.0, %v1113
    %v1115 = vpop.f32.mrb[0].mxu0
    %v1116 = vadd.f32 0.0, %v1115
    %1117 = vdwg.mxu0
    %v1118 = vadd.f32 %v1038, %v1114
    %v1119 = vadd.f32 %v1040, %v1116
    %s1120 = scalar_lea.vmem [#allocation8], 24
    %v1121 = vld [vmem:[%s1120] sm:$0xff]
    %v1123 = vsel %vm893, %v1121, 0
    %1125 = vmatprep.subr.mxu0 %v870
    %1126 = vmatpush1.msra.mxu0 %v868
    %1127 = vmatprep.subr.mxu0 %v876
    %1128 = vmatpush1.msra.mxu0 %v874
    %1129 = vmatprep.subr.mxu0 %v882
    %1130 = vmatpush1.msra.mxu0 %v880
    %1131 = vmatprep.subr.mxu0 %v888
    %1132 = vmatpush1.msra.mxu0 %v886
    %1133 = vmatprep.subr.mxu0 0.0
    %1134 = vmatpush1.msra.mxu0 0.0
    %1135 = vmatprep.subr.mxu0 0.0
    %1136 = vmatpush1.msra.mxu0 0.0
    %1137 = vmatprep.subr.mxu0 0.0
    %1138 = vmatpush1.msra.mxu0 0.0
    %1139 = vmatprep.subr.mxu0 0.0
    %1140 = vmatpush1.msra.mxu0 0.0
    %1141 = vmatprep.subr.mxu0 0.0
    %1142 = vmatpush1.msra.mxu0 0.0
    %1143 = vmatprep.subr.mxu0 0.0
    %1144 = vmatpush1.msra.mxu0 0.0
    %1145 = vmatprep.subr.mxu0 0.0
    %1146 = vmatpush1.msra.mxu0 0.0
    %1147 = vmatprep.subr.mxu0 0.0
    %1148 = vmatpush1.msra.mxu0 0.0
    %1149 = vmatprep.subr.mxu0 0.0
    %1150 = vmatpush1.msra.mxu0 0.0
    %1151 = vmatprep.subr.mxu0 0.0
    %1152 = vmatpush1.msra.mxu0 0.0
    %1153 = vmatprep.subr.mxu0 0.0
    %1154 = vmatpush1.msra.mxu0 0.0
    %1155 = vmatprep.subr.mxu0 0.0
    %1156 = vmatpush1.msra.mxu0 0.0
    %1157 = vmatprep.subr.mxu0 0.0
    %1158 = vmatpush1.msra.mxu0 0.0
    %1159 = vmatprep.subr.mxu0 0.0
    %1160 = vmatpush1.msra.mxu0 0.0
    %1161 = vmatprep.subr.mxu0 0.0
    %1162 = vmatpush1.msra.mxu0 0.0
    %1163 = vmatprep.subr.mxu0 0.0
    %1164 = vmatpush1.msra.mxu0 0.0
    %1165 = vmatprep.subr.mxu0 0.0
    %1166 = vmatpush1.msra.mxu0 0.0
    %1167 = vmatprep.subr.mxu0 0.0
    %1168 = vmatpush1.msra.mxu0 0.0
    %1169 = vmatprep.subr.mxu0 0.0
    %1170 = vmatpush1.msra.mxu0 0.0
    %1171 = vmatprep.subr.mxu0 0.0
    %1172 = vmatpush1.msra.mxu0 0.0
    %1173 = vmatprep.subr.mxu0 0.0
    %1174 = vmatpush1.msra.mxu0 0.0
    %1175 = vmatprep.subr.mxu0 0.0
    %1176 = vmatpush1.msra.mxu0 0.0
    %1177 = vmatprep.subr.mxu0 0.0
    %1178 = vmatpush1.msra.mxu0 0.0
    %1179 = vmatprep.subr.mxu0 0.0
    %1180 = vmatpush1.msra.mxu0 0.0
    %1181 = vmatprep.subr.mxu0 0.0
    %1182 = vmatpush1.msra.mxu0 0.0
    %1183 = vmatprep.subr.mxu0 0.0
    %1184 = vmatpush1.msra.mxu0 0.0
    %1185 = vmatprep.subr.mxu0 0.0
    %1186 = vmatpush1.msra.mxu0 0.0
    %1187 = vmatprep.subr.mxu0 0.0
    %1188 = vmatpush1.msra.mxu0 0.0
    %1189 = vmatprep.mubr.f32.mxu0 0.0
    %1190 = vmatmul.mubr.f32.gmra.mrb[0].mxu0 %v1123
    %v1191 = vpop.f32.mrb[0].mxu0
    %v1192 = vadd.f32 0.0, %v1191
    %v1193 = vpop.f32.mrb[0].mxu0
    %v1194 = vadd.f32 0.0, %v1193
    %1195 = vdwg.mxu0
    %v1196 = vadd.f32 %v1118, %v1192
    %v1197 = vadd.f32 %v1119, %v1194
    %v1198 = vld [vmem:[%s6] sm:$0x3]
    %v1200 = vlaneseq
    %v1201 = vshrl.u32 %v1200, 7
    %v1202 = vsub.s32 0, %v1201
    %v1203 = vrot.slane %v1198, %v1202
    %v1204 = vlaneseq
    %v1205 = vshrl.u32 %v1204, 7
    %v1206 = vsub.s32 1, %v1205
    %v1207 = vrot.slane %v1198, %v1206
    %v1210 = vadd.f32 %v1196, %v1203
    %v1211 = vadd.f32 %v1197, %v1207
    %v1212 = vmax.f32 %v1210, 1e-06
    %v1213 = vmax.f32 %v1211, 1e-06
    %v1214 = vmul.f32 %v1212, %v1212
    %v1215 = vmul.f32 %v1213, %v1213
    %v1216 = vmul.f32 %v1214, %v1212
    %v1217 = vmul.f32 %v1215, %v1213
    %v1218 = vld [vmem:[%s7] sm:$0x3]
    %vm1219 = vcmask 64512
    %v1221 = vsel %vm1219, %v1218, 0
    %1223 = vmatprep.subr.mxu0 %v1217
    %1224 = vmatpush1.msra.mxu0 %v1216
    %1225 = vmatprep.subr.mxu0 0.0
    %1226 = vmatpush1.msra.mxu0 0.0
    %1227 = vmatprep.subr.mxu0 0.0
    %1228 = vmatpush1.msra.mxu0 0.0
    %1229 = vmatprep.subr.mxu0 0.0
    %1230 = vmatpush1.msra.mxu0 0.0
    %1231 = vmatprep.subr.mxu0 0.0
    %1232 = vmatpush1.msra.mxu0 0.0
    %1233 = vmatprep.subr.mxu0 0.0
    %1234 = vmatpush1.msra.mxu0 0.0
    %1235 = vmatprep.subr.mxu0 0.0
    %1236 = vmatpush1.msra.mxu0 0.0
    %1237 = vmatprep.subr.mxu0 0.0
    %1238 = vmatpush1.msra.mxu0 0.0
    %1239 = vmatprep.subr.mxu0 0.0
    %1240 = vmatpush1.msra.mxu0 0.0
    %1241 = vmatprep.subr.mxu0 0.0
    %1242 = vmatpush1.msra.mxu0 0.0
    %1243 = vmatprep.subr.mxu0 0.0
    %1244 = vmatpush1.msra.mxu0 0.0
    %1245 = vmatprep.subr.mxu0 0.0
    %1246 = vmatpush1.msra.mxu0 0.0
    %1247 = vmatprep.subr.mxu0 0.0
    %1248 = vmatpush1.msra.mxu0 0.0
    %1249 = vmatprep.subr.mxu0 0.0
    %1250 = vmatpush1.msra.mxu0 0.0
    %1251 = vmatprep.subr.mxu0 0.0
    %1252 = vmatpush1.msra.mxu0 0.0
    %1253 = vmatprep.subr.mxu0 0.0
    %1254 = vmatpush1.msra.mxu0 0.0
    %1255 = vmatprep.subr.mxu0 0.0
    %1256 = vmatpush1.msra.mxu0 0.0
    %1257 = vmatprep.subr.mxu0 0.0
    %1258 = vmatpush1.msra.mxu0 0.0
    %1259 = vmatprep.subr.mxu0 0.0
    %1260 = vmatpush1.msra.mxu0 0.0
    %1261 = vmatprep.subr.mxu0 0.0
    %1262 = vmatpush1.msra.mxu0 0.0
    %1263 = vmatprep.subr.mxu0 0.0
    %1264 = vmatpush1.msra.mxu0 0.0
    %1265 = vmatprep.subr.mxu0 0.0
    %1266 = vmatpush1.msra.mxu0 0.0
    %1267 = vmatprep.subr.mxu0 0.0
    %1268 = vmatpush1.msra.mxu0 0.0
    %1269 = vmatprep.subr.mxu0 0.0
    %1270 = vmatpush1.msra.mxu0 0.0
    %1271 = vmatprep.subr.mxu0 0.0
    %1272 = vmatpush1.msra.mxu0 0.0
    %1273 = vmatprep.subr.mxu0 0.0
    %1274 = vmatpush1.msra.mxu0 0.0
    %1275 = vmatprep.subr.mxu0 0.0
    %1276 = vmatpush1.msra.mxu0 0.0
    %1277 = vmatprep.subr.mxu0 0.0
    %1278 = vmatpush1.msra.mxu0 0.0
    %1279 = vmatprep.subr.mxu0 0.0
    %1280 = vmatpush1.msra.mxu0 0.0
    %1281 = vmatprep.subr.mxu0 0.0
    %1282 = vmatpush1.msra.mxu0 0.0
    %1283 = vmatprep.subr.mxu0 0.0
    %1284 = vmatpush1.msra.mxu0 0.0
    %1285 = vmatprep.subr.mxu0 0.0
    %1286 = vmatpush1.msra.mxu0 0.0
    %1287 = vmatprep.mubr.f32.mxu0 0.0
    %1288 = vmatmul.mubr.f32.gmra.mrb[0].mxu0 %v1221
    %v1289 = vpop.f32.mrb[0].mxu0
    %v1290 = vadd.f32 0.0, %v1289
    %v1291 = vpop.f32.mrb[0].mxu0
    %v1292 = vadd.f32 0.0, %v1291
    %1293 = vdwg.mxu0
    %v1294 = vld [vmem:[%s8] sm:$0xff]
    %v1295 = vld [vmem:[%s8 + $0x8] sm:$0xff]
    %v1296 = vld [vmem:[%s8 + $0x10] sm:$0xff]
    %v1297 = vld [vmem:[%s8 + $0x18] sm:$0xff]
    %v1298 = vld [vmem:[%s8 + $0x20] sm:$0xff]
    %v1299 = vld [vmem:[%s8 + $0x28] sm:$0xff]
    %v1300 = vld [vmem:[%s8 + $0x30] sm:$0xff]
    %v1301 = vld [vmem:[%s8 + $0x38] sm:$0xff]
    %v1302 = vld [vmem:[%s8 + $0x40] sm:$0xff]
    %v1303 = vld [vmem:[%s8 + $0x48] sm:$0xff]
    %v1304 = vld [vmem:[%s8 + $0x50] sm:$0xff]
    %v1305 = vld [vmem:[%s8 + $0x58] sm:$0xff]
    %v1306 = vld [vmem:[%s8 + $0x60] sm:$0xff]
    %v1307 = vld [vmem:[%s8 + $0x68] sm:$0xff]
    %v1308 = vld [vmem:[%s8 + $0x70] sm:$0xff]
    %v1309 = vld [vmem:[%s8 + $0x78] sm:$0xff]
    %v1310 = vld [vmem:[%s8 + $0x80] sm:$0xff]
    %v1311 = vld [vmem:[%s8 + $0x88] sm:$0xff]
    %v1312 = vld [vmem:[%s8 + $0x90] sm:$0xff]
    %v1313 = vld [vmem:[%s8 + $0x98] sm:$0xff]
    %v1314 = vld [vmem:[%s8 + $0xa0] sm:$0xff]
    %v1315 = vld [vmem:[%s8 + $0xa8] sm:$0xff]
    %v1316 = vld [vmem:[%s8 + $0xb0] sm:$0xff]
    %v1317 = vld [vmem:[%s8 + $0xb8] sm:$0xff]
    %v1318 = vld [vmem:[%s8 + $0xc0] sm:$0xff]
    %v1319 = vld [vmem:[%s8 + $0xc8] sm:$0xff]
    %v1320 = vld [vmem:[%s8 + $0xd0] sm:$0xff]
    %v1321 = vld [vmem:[%s8 + $0xd8] sm:$0xff]
    %v1322 = vld [vmem:[%s8 + $0xe0] sm:$0xff]
    %v1323 = vld [vmem:[%s8 + $0xe8] sm:$0xff]
    %v1324 = vld [vmem:[%s8 + $0xf0] sm:$0xff]
    %v1325 = vld [vmem:[%s8 + $0xf8] sm:$0xff]
    %1326 = vmatprep.subr.mxu0 0.0
    %1327 = vmatpush1.msra.mxu0 %v1294
    %1328 = vmatprep.subr.mxu0 0.0
    %1329 = vmatpush1.msra.mxu0 %v1295
    %1330 = vmatprep.subr.mxu0 0.0
    %1331 = vmatpush1.msra.mxu0 %v1296
    %1332 = vmatprep.subr.mxu0 0.0
    %1333 = vmatpush1.msra.mxu0 %v1297
    %1334 = vmatprep.subr.mxu0 0.0
    %1335 = vmatpush1.msra.mxu0 %v1298
    %1336 = vmatprep.subr.mxu0 0.0
    %1337 = vmatpush1.msra.mxu0 %v1299
    %1338 = vmatprep.subr.mxu0 0.0
    %1339 = vmatpush1.msra.mxu0 %v1300
    %1340 = vmatprep.subr.mxu0 0.0
    %1341 = vmatpush1.msra.mxu0 %v1301
    %1342 = vmatprep.subr.mxu0 0.0
    %1343 = vmatpush1.msra.mxu0 %v1302
    %1344 = vmatprep.subr.mxu0 0.0
    %1345 = vmatpush1.msra.mxu0 %v1303
    %1346 = vmatprep.subr.mxu0 0.0
    %1347 = vmatpush1.msra.mxu0 %v1304
    %1348 = vmatprep.subr.mxu0 0.0
    %1349 = vmatpush1.msra.mxu0 %v1305
    %1350 = vmatprep.subr.mxu0 0.0
    %1351 = vmatpush1.msra.mxu0 %v1306
    %1352 = vmatprep.subr.mxu0 0.0
    %1353 = vmatpush1.msra.mxu0 %v1307
    %1354 = vmatprep.subr.mxu0 0.0
    %1355 = vmatpush1.msra.mxu0 %v1308
    %1356 = vmatprep.subr.mxu0 0.0
    %1357 = vmatpush1.msra.mxu0 %v1309
    %1358 = vmatprep.subr.mxu0 0.0
    %1359 = vmatpush1.msra.mxu0 %v1310
    %1360 = vmatprep.subr.mxu0 0.0
    %1361 = vmatpush1.msra.mxu0 %v1311
    %1362 = vmatprep.subr.mxu0 0.0
    %1363 = vmatpush1.msra.mxu0 %v1312
    %1364 = vmatprep.subr.mxu0 0.0
    %1365 = vmatpush1.msra.mxu0 %v1313
    %1366 = vmatprep.subr.mxu0 0.0
    %1367 = vmatpush1.msra.mxu0 %v1314
    %1368 = vmatprep.subr.mxu0 0.0
    %1369 = vmatpush1.msra.mxu0 %v1315
    %1370 = vmatprep.subr.mxu0 0.0
    %1371 = vmatpush1.msra.mxu0 %v1316
    %1372 = vmatprep.subr.mxu0 0.0
    %1373 = vmatpush1.msra.mxu0 %v1317
    %1374 = vmatprep.subr.mxu0 0.0
    %1375 = vmatpush1.msra.mxu0 %v1318
    %1376 = vmatprep.subr.mxu0 0.0
    %1377 = vmatpush1.msra.mxu0 %v1319
    %1378 = vmatprep.subr.mxu0 0.0
    %1379 = vmatpush1.msra.mxu0 %v1320
    %1380 = vmatprep.subr.mxu0 0.0
    %1381 = vmatpush1.msra.mxu0 %v1321
    %1382 = vmatprep.subr.mxu0 0.0
    %1383 = vmatpush1.msra.mxu0 %v1322
    %1384 = vmatprep.subr.mxu0 0.0
    %1385 = vmatpush1.msra.mxu0 %v1323
    %1386 = vmatprep.subr.mxu0 0.0
    %1387 = vmatpush1.msra.mxu0 %v1324
    %1388 = vmatprep.subr.mxu0 0.0
    %1389 = vmatpush1.msra.mxu0 %v1325
    %1390 = vmatprep.mubr.f32.mxu0 %v1292
    %1391 = vmatmul.mubr.f32.gmra.mrb[0].mxu0 %v1290
    %v1392 = vpop.f32.mrb[0].mxu0
    %v1393 = vadd.f32 0.0, %v1392
    %v1394 = vpop.f32.mrb[0].mxu0
    %1395 = vdwg.mxu0
    %v1396 = vmul.f32 %v1393, 0.03125
    %v1397 = vlog2.pop %v1396
    %v1398 = vmul.f32 %v1397, 0.6931472
    %v1399 = vmul.f32 %v1398, 0.33333334
    %v1400 = vmul.f32 %v1399, 1.442695
    %v1401 = vpow.pop %v1400
    %v1402 = vld [vmem:[#allocation10] sm:$0xff]
    %v1403 = vld [vmem:[#allocation10 + $0x8] sm:$0xff]
    %v1404 = vld [vmem:[#allocation10 + $0x10] sm:$0xff]
    %v1405 = vld [vmem:[#allocation10 + $0x18] sm:$0xff]
    %v1406 = vld [vmem:[%s10] sm:$0x1]
    %v1408 = vlaneseq
    %v1409 = vshrl.u32 %v1408, 7
    %v1410 = vsub.s32 0, %v1409
    %v1411 = vrot.slane %v1406, %v1410
    %v1414 = vsel %vm893, %v1401, 0
    %1416 = vmatprep.subr.mxu0 0.0
    %1417 = vmatpush1.msra.mxu0 %v1402
    %1418 = vmatprep.subr.mxu0 0.0
    %1419 = vmatpush1.msra.mxu0 %v1403
    %1420 = vmatprep.subr.mxu0 0.0
    %1421 = vmatpush1.msra.mxu0 %v1404
    %1422 = vmatprep.subr.mxu0 0.0
    %1423 = vmatpush1.msra.mxu0 %v1405
    %1424 = vmatprep.subr.mxu0 0.0
    %1425 = vmatpush1.msra.mxu0 0.0
    %1426 = vmatprep.subr.mxu0 0.0
    %1427 = vmatpush1.msra.mxu0 0.0
    %1428 = vmatprep.subr.mxu0 0.0
    %1429 = vmatpush1.msra.mxu0 0.0
    %1430 = vmatprep.subr.mxu0 0.0
    %1431 = vmatpush1.msra.mxu0 0.0
    %1432 = vmatprep.subr.mxu0 0.0
    %1433 = vmatpush1.msra.mxu0 0.0
    %1434 = vmatprep.subr.mxu0 0.0
    %1435 = vmatpush1.msra.mxu0 0.0
    %1436 = vmatprep.subr.mxu0 0.0
    %1437 = vmatpush1.msra.mxu0 0.0
    %1438 = vmatprep.subr.mxu0 0.0
    %1439 = vmatpush1.msra.mxu0 0.0
    %1440 = vmatprep.subr.mxu0 0.0
    %1441 = vmatpush1.msra.mxu0 0.0
    %1442 = vmatprep.subr.mxu0 0.0
    %1443 = vmatpush1.msra.mxu0 0.0
    %1444 = vmatprep.subr.mxu0 0.0
    %1445 = vmatpush1.msra.mxu0 0.0
    %1446 = vmatprep.subr.mxu0 0.0
    %1447 = vmatpush1.msra.mxu0 0.0
    %1448 = vmatprep.subr.mxu0 0.0
    %1449 = vmatpush1.msra.mxu0 0.0
    %1450 = vmatprep.subr.mxu0 0.0
    %1451 = vmatpush1.msra.mxu0 0.0
    %1452 = vmatprep.subr.mxu0 0.0
    %1453 = vmatpush1.msra.mxu0 0.0
    %1454 = vmatprep.subr.mxu0 0.0
    %1455 = vmatpush1.msra.mxu0 0.0
    %1456 = vmatprep.subr.mxu0 0.0
    %1457 = vmatpush1.msra.mxu0 0.0
    %1458 = vmatprep.subr.mxu0 0.0
    %1459 = vmatpush1.msra.mxu0 0.0
    %1460 = vmatprep.subr.mxu0 0.0
    %1461 = vmatpush1.msra.mxu0 0.0
    %1462 = vmatprep.subr.mxu0 0.0
    %1463 = vmatpush1.msra.mxu0 0.0
    %1464 = vmatprep.subr.mxu0 0.0
    %1465 = vmatpush1.msra.mxu0 0.0
    %1466 = vmatprep.subr.mxu0 0.0
    %1467 = vmatpush1.msra.mxu0 0.0
    %1468 = vmatprep.subr.mxu0 0.0
    %1469 = vmatpush1.msra.mxu0 0.0
    %1470 = vmatprep.subr.mxu0 0.0
    %1471 = vmatpush1.msra.mxu0 0.0
    %1472 = vmatprep.subr.mxu0 0.0
    %1473 = vmatpush1.msra.mxu0 0.0
    %1474 = vmatprep.subr.mxu0 0.0
    %1475 = vmatpush1.msra.mxu0 0.0
    %1476 = vmatprep.subr.mxu0 0.0
    %1477 = vmatpush1.msra.mxu0 0.0
    %1478 = vmatprep.subr.mxu0 0.0
    %1479 = vmatpush1.msra.mxu0 0.0
    %1480 = vmatprep.mubr.f32.mxu0 0.0
    %1481 = vmatmul.mubr.f32.gmra.mrb[0].mxu0 %v1414
    %v1482 = vpop.f32.mrb[0].mxu0
    %v1483 = vadd.f32 %v1411, %v1482
    %v1484 = vpop.f32.mrb[0].mxu0
    %1485 = vdwg.mxu0
    %v1486 = vmul.f32 %v1483, 0.5
    %v1487 = vmul.f32 %v1483, 0.044715
    %v1488 = vmul.f32 %v1487, %v1483
    %v1489 = vmul.f32 %v1488, %v1483
    %v1490 = vadd.f32 %v1483, %v1489
    %v1491 = vmul.f32 %v1490, 0.7978846
    %v1492 = vtanh.pop %v1491
    %v1493 = vadd.f32 %v1492, 1.0
    %v1494 = vmul.f32 %v1486, %v1493
    %v1495 = vld [vmem:[#allocation11] sm:$0xff]
    %v1496 = vld [vmem:[#allocation11 + $0x8] sm:$0xff]
    %v1497 = vld [vmem:[#allocation11 + $0x10] sm:$0xff]
    %v1498 = vld [vmem:[#allocation11 + $0x18] sm:$0xff]
    %v1499 = vld [vmem:[#allocation11 + $0x20] sm:$0xff]
    %v1500 = vld [vmem:[#allocation11 + $0x28] sm:$0xff]
    %v1501 = vld [vmem:[#allocation11 + $0x30] sm:$0xff]
    %v1502 = vld [vmem:[#allocation11 + $0x38] sm:$0xff]
    %v1503 = vld [vmem:[#allocation11 + $0x40] sm:$0xff]
    %v1504 = vld [vmem:[#allocation11 + $0x48] sm:$0xff]
    %v1505 = vld [vmem:[#allocation11 + $0x50] sm:$0xff]
    %v1506 = vld [vmem:[#allocation11 + $0x58] sm:$0xff]
    %v1507 = vld [vmem:[#allocation11 + $0x60] sm:$0xff]
    %v1508 = vld [vmem:[#allocation11 + $0x68] sm:$0xff]
    %v1509 = vld [vmem:[#allocation11 + $0x70] sm:$0xff]
    %v1510 = vld [vmem:[#allocation11 + $0x78] sm:$0xff]
    %v1511 = vld [vmem:[%s12] sm:$0x1]
    %v1513 = vlaneseq
    %v1514 = vshrl.u32 %v1513, 7
    %v1515 = vsub.s32 0, %v1514
    %v1516 = vrot.slane %v1511, %v1515
    %1518 = vmatprep.subr.mxu0 0.0
    %1519 = vmatpush1.msra.mxu0 %v1495
    %1520 = vmatprep.subr.mxu0 0.0
    %1521 = vmatpush1.msra.mxu0 %v1496
    %1522 = vmatprep.subr.mxu0 0.0
    %1523 = vmatpush1.msra.mxu0 %v1497
    %1524 = vmatprep.subr.mxu0 0.0
    %1525 = vmatpush1.msra.mxu0 %v1498
    %1526 = vmatprep.subr.mxu0 0.0
    %1527 = vmatpush1.msra.mxu0 %v1499
    %1528 = vmatprep.subr.mxu0 0.0
    %1529 = vmatpush1.msra.mxu0 %v1500
    %1530 = vmatprep.subr.mxu0 0.0
    %1531 = vmatpush1.msra.mxu0 %v1501
    %1532 = vmatprep.subr.mxu0 0.0
    %1533 = vmatpush1.msra.mxu0 %v1502
    %1534 = vmatprep.subr.mxu0 0.0
    %1535 = vmatpush1.msra.mxu0 %v1503
    %1536 = vmatprep.subr.mxu0 0.0
    %1537 = vmatpush1.msra.mxu0 %v1504
    %1538 = vmatprep.subr.mxu0 0.0
    %1539 = vmatpush1.msra.mxu0 %v1505
    %1540 = vmatprep.subr.mxu0 0.0
    %1541 = vmatpush1.msra.mxu0 %v1506
    %1542 = vmatprep.subr.mxu0 0.0
    %1543 = vmatpush1.msra.mxu0 %v1507
    %1544 = vmatprep.subr.mxu0 0.0
    %1545 = vmatpush1.msra.mxu0 %v1508
    %1546 = vmatprep.subr.mxu0 0.0
    %1547 = vmatpush1.msra.mxu0 %v1509
    %1548 = vmatprep.subr.mxu0 0.0
    %1549 = vmatpush1.msra.mxu0 %v1510
    %1550 = vmatprep.subr.mxu0 0.0
    %1551 = vmatpush1.msra.mxu0 0.0
    %1552 = vmatprep.subr.mxu0 0.0
    %1553 = vmatpush1.msra.mxu0 0.0
    %1554 = vmatprep.subr.mxu0 0.0
    %1555 = vmatpush1.msra.mxu0 0.0
    %1556 = vmatprep.subr.mxu0 0.0
    %1557 = vmatpush1.msra.mxu0 0.0
    %1558 = vmatprep.subr.mxu0 0.0
    %1559 = vmatpush1.msra.mxu0 0.0
    %1560 = vmatprep.subr.mxu0 0.0
    %1561 = vmatpush1.msra.mxu0 0.0
    %1562 = vmatprep.subr.mxu0 0.0
    %1563 = vmatpush1.msra.mxu0 0.0
    %1564 = vmatprep.subr.mxu0 0.0
    %1565 = vmatpush1.msra.mxu0 0.0
    %1566 = vmatprep.subr.mxu0 0.0
    %1567 = vmatpush1.msra.mxu0 0.0
    %1568 = vmatprep.subr.mxu0 0.0
    %1569 = vmatpush1.msra.mxu0 0.0
    %1570 = vmatprep.subr.mxu0 0.0
    %1571 = vmatpush1.msra.mxu0 0.0
    %1572 = vmatprep.subr.mxu0 0.0
    %1573 = vmatpush1.msra.mxu0 0.0
    %1574 = vmatprep.subr.mxu0 0.0
    %1575 = vmatpush1.msra.mxu0 0.0
    %1576 = vmatprep.subr.mxu0 0.0
    %1577 = vmatpush1.msra.mxu0 0.0
    %1578 = vmatprep.subr.mxu0 0.0
    %1579 = vmatpush1.msra.mxu0 0.0
    %1580 = vmatprep.subr.mxu0 0.0
    %1581 = vmatpush1.msra.mxu0 0.0
    %1582 = vmatprep.mubr.f32.mxu0 0.0
    %1583 = vmatmul.mubr.f32.gmra.mrb[0].mxu0 %v1494
    %v1584 = vpop.f32.mrb[0].mxu0
    %v1585 = vadd.f32 %v1516, %v1584
    %v1586 = vpop.f32.mrb[0].mxu0
    %1587 = vdwg.mxu0
    %1588 = vst [vmem:[#allocation13] sm:$0x3] %v1585
    // Predicated region
    $region78: #{tpu_custom_call.1} parent=1 // pred_check
      _
    $region79: #{tpu_custom_call.1} parent=1 // pred_check_branch
      %1590 = sbr.rel (0) target = $region81
    $region80: #{tpu_custom_call.1} parent=1 // pred_region
      %s1592 = ssub.s32 32, 32
      %1593 = vsyncadd [#allocation4], %s1592
      %s1595 = sshll.u32 [#allocation13], 4
      %s1596 = int_to_ptr.vmem [resolvable:$true] %s1595
      %1598 = dma.vmem_to_hbm [thread:$0]  %s1596, 32, %s13, [#allocation4]
    $region81: #{tpu_custom_call.1} parent=1 // pred_fallthru
      _
    // Predicated region
    $region82: #{tpu_custom_call.1} parent=1 // pred_check
      _
    $region83: #{tpu_custom_call.1} parent=1 // pred_check_branch
      %1600 = sbr.rel (0) target = $region85
    $region84: #{tpu_custom_call.1} parent=1 // pred_region
      %1601 = dma.done [#allocation4], 32
    $region85: #{tpu_custom_call.1} parent=1 // pred_fallthru
      _
    %1602 = vsyncpa [#allocation3], 1
    %1603 = vsyncpa [#allocation6], 1
    %1604 = vsyncpa [#allocation9], 1
    %1605 = vsyncpa [#allocation12], 1
    %1606 = vsyncpa [#allocation4], 1

</llo_original>
